<compile_context>
chip_gen: v7x
topology: tpu7x:2x2x1
jax: 0.10.0
libtpu: 0.0.40
codegen_flags: <defaults>
</compile_context>

<pallas_src>
import functools

import jax
import jax.numpy as jnp
from jax.experimental import pallas as pl
from jax.experimental.pallas import tpu as pltpu


# -----------------------------------------------------------------------------
# Fused kernel
# -----------------------------------------------------------------------------
def _double_conv_kernel(x_ref, w1_ref, b1_ref, g1_ref, bb1_ref,
                        w2_ref, b2_ref, g2_ref, bb2_ref,
                        o_ref, *, n, h, w, cin, cout, eps):
    # x_ref:  (N*H, W*Cin)           lane-dense input rows
    # w?_ref: (3, W*Cin?, W*Cout)    banded weights (horizontal halo folded in)
    # b/g/bb: (1, W*Cout)            bias / gamma / beta, tiled over x
    # o_ref:  (N*H, W*Cout)          lane-dense output rows
    m = n * h
    wc_out = w * cout
    inv_cnt = 1.0 / float(n * h * w)

    # Row-id masks for the vertical taps: in-image row 0 has no "up" neighbour,
    # row H-1 has no "down" neighbour (padding=1 -> zero contribution).
    hrow = jax.lax.broadcasted_iota(jnp.int32, (m, 1), 0) % h
    keep_up = hrow != 0                                   # (m, 1)
    keep_dn = hrow != h - 1

    # Constant 0/1 pool / broadcast matrices for per-channel BN stats over the
    # interleaved (x, c) lanes, built in-register (no HBM input, no DMA).
    pool = (jax.lax.broadcasted_iota(jnp.int32, (wc_out, cout), 0) % cout ==
            jax.lax.broadcasted_iota(jnp.int32, (wc_out, cout), 1)
            ).astype(jnp.float32)                          # (W*Cout, Cout)
    bcast = (jax.lax.broadcasted_iota(jnp.int32, (cout, wc_out), 0) ==
             jax.lax.broadcasted_iota(jnp.int32, (cout, wc_out), 1) % cout
             ).astype(jnp.float32)                         # (Cout, W*Cout)

    def conv3x3_relu(xf, wband_ref, bias_row):
        # Vertical shifts on the XLU (sublane roll) + boundary mask; the
        # horizontal taps live inside the banded weight.  No pad scratch,
        # no unaligned slices, no reshapes.
        x_up = jnp.where(keep_up, pltpu.roll(xf, shift=1, axis=0), 0.0)
        x_dn = jnp.where(keep_dn, pltpu.roll(xf, shift=m - 1, axis=0), 0.0)
        acc = jnp.dot(x_up, wband_ref[0], preferred_element_type=jnp.float32)
        acc = acc + jnp.dot(xf, wband_ref[1], preferred_element_type=jnp.float32)
        acc = acc + jnp.dot(x_dn, wband_ref[2], preferred_element_type=jnp.float32)
        return jnp.maximum(acc + bias_row, 0.0)            # fused bias + ReLU

    def batchnorm(y, gamma_row, beta_row):
        # y: (N*H, W*Cout), lane l = x*Cout + c.  Single pass over y.
        # NOTE: E[x^2]-E[x]^2 variance is fine in f32 at these magnitudes.
        s_lane = jnp.sum(y, axis=0, keepdims=True)         # (1, W*Cout)
        ss_lane = jnp.sum(y * y, axis=0, keepdims=True)    # (1, W*Cout)
        stats_ch = jnp.dot(jnp.concatenate([s_lane, ss_lane], axis=0), pool,
                           preferred_element_type=jnp.float32)   # (2, Cout)
        mean_ch = stats_ch[0:1] * inv_cnt
        var_ch = stats_ch[1:2] * inv_cnt - mean_ch * mean_ch     # biased var
        inv_ch = jax.lax.rsqrt(var_ch + eps)
        mi_lane = jnp.dot(jnp.concatenate([mean_ch, inv_ch], axis=0), bcast,
                          preferred_element_type=jnp.float32)    # (2, W*Cout)
        scale = mi_lane[1:2] * gamma_row                   # inv * gamma
        shift = beta_row - mi_lane[0:1] * scale            # beta - mean*inv*gamma
        return y * scale + shift                           # single FMA pass

    # ---- stage 1: conv1 + ReLU -> BN1 (all in vregs) ----
    y = conv3x3_relu(x_ref[...], w1_ref, b1_ref[...])
    y = batchnorm(y, g1_ref[...], bb1_ref[...])

    # ---- stage 2: conv2 + ReLU -> BN2 ----
    y = conv3x3_relu(y, w2_ref, b2_ref[...])
    y = batchnorm(y, g2_ref[...], bb2_ref[...])

    o_ref[...] = y.astype(o_ref.dtype)                     # one full-width store


# -----------------------------------------------------------------------------
# Wrapper: layout plumbing (NCHW <-> lane-dense rows) + banded-weight prep
# -----------------------------------------------------------------------------
def _banded_weights(w_hwio, width):
    """Fold the 3-wide horizontal taps (and the padding=1 halo) into a banded
    matrix:  Wb[dy][xp*Cin+ci, x*Cout+co] = w[dy, xp-x+1, ci, co]  (0 outside)."""
    kh, kw, cin, cout = w_hwio.shape
    x_idx = jnp.arange(width)
    # ind[dx, x, xp] = 1 iff xp == x + dx - 1 (out-of-range taps drop out = padding)
    ind = (x_idx[None, None, :] ==
           (x_idx[None, :, None] + jnp.arange(kw)[:, None, None] - 1)
           ).astype(w_hwio.dtype)                           # (kw, width, width)
    t = jnp.einsum('dxp,kdio->kpixo', ind, w_hwio)          # (kh, W, Cin, W, Cout)
    return t.reshape(kh, width * cin, width * cout)


def double_conv(x_nchw, params, eps=1e-5):
    n, cin, h, w = x_nchw.shape
    cout = params["w1"].shape[-1]

    # NCHW -> flat lane-dense rows (N*H, W*Cin)
    x_rows = jnp.transpose(x_nchw, (0, 2, 3, 1)).reshape(n * h, w * cin)

    w1b = _banded_weights(params["w1"].astype(jnp.float32), w)   # (3, W*Cin,  W*Cout)
    w2b = _banded_weights(params["w2"].astype(jnp.float32), w)   # (3, W*Cout, W*Cout)

    def tile_lane(v):                                            # (Cout,) -> (1, W*Cout)
        return jnp.tile(v.astype(jnp.float32), w).reshape(1, w * cout)

    b1t, g1t, bb1t = tile_lane(params["b1"]), tile_lane(params["g1"]), tile_lane(params["beta1"])
    b2t, g2t, bb2t = tile_lane(params["b2"]), tile_lane(params["g2"]), tile_lane(params["beta2"])

    kernel = functools.partial(_double_conv_kernel,
                               n=n, h=h, w=w, cin=cin, cout=cout, eps=eps)
    out_rows = pl.pallas_call(
        kernel,
        out_shape=jax.ShapeDtypeStruct((n * h, w * cout), jnp.float32),
    )(x_rows, w1b, b1t, g1t, bb1t, w2b, b2t, g2t, bb2t)

    # lane-dense rows -> NCHW
    return jnp.transpose(out_rows.reshape(n, h, w, cout), (0, 3, 1, 2))


# -----------------------------------------------------------------------------
# Pure-JAX reference (for correctness check)
# -----------------------------------------------------------------------------
def ref_conv(x_nchw, w_oihw, bias):
    y = jax.lax.conv_general_dilated(
        x_nchw, w_oihw, window_strides=(1, 1), padding="SAME",
        dimension_numbers=("NCHW", "OIHW", "NCHW"))
    return y + bias[None, :, None, None]


def ref_bn(x_nchw, gamma, beta, eps=1e-5):
    mean = jnp.mean(x_nchw, axis=(0, 2, 3), keepdims=True)
    var = jnp.mean((x_nchw - mean) ** 2, axis=(0, 2, 3), keepdims=True)
    return ((x_nchw - mean) * jax.lax.rsqrt(var + eps)
            * gamma[None, :, None, None] + beta[None, :, None, None])


def ref_double_conv(x, p):
    w1_oihw = jnp.transpose(p["w1"], (3, 2, 0, 1))
    w2_oihw = jnp.transpose(p["w2"], (3, 2, 0, 1))
    x = jnp.maximum(ref_conv(x, w1_oihw, p["b1"]), 0.0)
    x = ref_bn(x, p["g1"], p["beta1"])
    x = jnp.maximum(ref_conv(x, w2_oihw, p["b2"]), 0.0)
    x = ref_bn(x, p["g2"], p["beta2"])
    return x


if __name__ == "__main__":
    key = jax.random.PRNGKey(0)
    k_x, k_w1, k_b1, k_w2, k_b2 = jax.random.split(key, 5)

    N, IN_CH, OUT_CH, H, W = 2, 4, 8, 16, 16

    x = jax.random.normal(k_x, (N, IN_CH, H, W), dtype=jnp.float32)

    # Conv weights stored HWIO for the kernel; BN affine params are the
    # PyTorch defaults (gamma=1, beta=0).
    params = {
        "w1": jax.random.normal(k_w1, (3, 3, IN_CH, OUT_CH), jnp.float32) * 0.1,
        "b1": jax.random.normal(k_b1, (OUT_CH,), jnp.float32) * 0.1,
        "g1": jnp.ones((OUT_CH,), jnp.float32),
        "beta1": jnp.zeros((OUT_CH,), jnp.float32),
        "w2": jax.random.normal(k_w2, (3, 3, OUT_CH, OUT_CH), jnp.float32) * 0.1,
        "b2": jax.random.normal(k_b2, (OUT_CH,), jnp.float32) * 0.1,
        "g2": jnp.ones((OUT_CH,), jnp.float32),
        "beta2": jnp.zeros((OUT_CH,), jnp.float32),
    }

    fwd = jax.jit(double_conv)
    out = jax.block_until_ready(fwd(x, params))
    ref = jax.block_until_ready(ref_double_conv(x, params))

    assert out.shape == (N, OUT_CH, H, W), out.shape
    assert jnp.allclose(out, ref, atol=2e-4, rtol=2e-4), (
        float(jnp.max(jnp.abs(out - ref))))

    print("KERNEL_OK")
</pallas_src>

<mosaic_0001>
module attributes {stable_mosaic.version = 11 : i64} {
  func.func @_double_conv_kernel(%arg0: memref<32x64xf32, #tpu.memory_space<vmem>>, %arg1: memref<3x64x128xf32, #tpu.memory_space<vmem>>, %arg2: memref<1x128xf32, #tpu.memory_space<vmem>>, %arg3: memref<1x128xf32, #tpu.memory_space<vmem>>, %arg4: memref<1x128xf32, #tpu.memory_space<vmem>>, %arg5: memref<3x128x128xf32, #tpu.memory_space<vmem>>, %arg6: memref<1x128xf32, #tpu.memory_space<vmem>>, %arg7: memref<1x128xf32, #tpu.memory_space<vmem>>, %arg8: memref<1x128xf32, #tpu.memory_space<vmem>>, %arg9: memref<32x128xf32, #tpu.memory_space<vmem>>) attributes {dimension_semantics = [], scalar_prefetch = 0 : i64, scratch_operands = 0 : i64, tpu.core_type = #tpu.core_type<tc>} {
    %0 = tpu.iota {dimensions = array<i32: 0>} : vector<32x1xi32>
    %c16_i32 = arith.constant 16 : i32
    %c0_i32 = arith.constant 0 : i32
    %1 = arith.cmpi eq, %c16_i32, %c0_i32 : i32
    %c1_i32 = arith.constant 1 : i32
    %2 = arith.select %1, %c1_i32, %c16_i32 : i32
    %3 = vector.broadcast %2 : i32 to vector<32x1xi32>
    %4 = arith.remsi %0, %3 : vector<32x1xi32>
    %c0_i32_0 = arith.constant 0 : i32
    %5 = vector.broadcast %c0_i32_0 : i32 to vector<32x1xi32>
    %6 = arith.cmpi ne, %4, %5 : vector<32x1xi32>
    %c0_i32_1 = arith.constant 0 : i32
    %7 = vector.broadcast %c0_i32_1 : i32 to vector<32x1xi32>
    %8 = arith.cmpi slt, %4, %7 : vector<32x1xi32>
    %c0_i32_2 = arith.constant 0 : i32
    %9 = arith.cmpi slt, %2, %c0_i32_2 : i32
    %10 = vector.broadcast %9 : i1 to vector<32x1xi1>
    %11 = vector.broadcast %10 : vector<32x1xi1> to vector<32x1xi1>
    %12 = arith.xori %8, %11 : vector<32x1xi1>
    %13 = arith.andi %12, %6 : vector<32x1xi1>
    %14 = vector.broadcast %2 : i32 to vector<32x1xi32>
    %15 = arith.addi %4, %14 : vector<32x1xi32>
    %16 = arith.select %13, %15, %4 : vector<32x1xi1>, vector<32x1xi32>
    %c0_i32_3 = arith.constant 0 : i32
    %17 = vector.broadcast %c0_i32_3 : i32 to vector<32x1xi32>
    %18 = arith.cmpi ne, %16, %17 : vector<32x1xi32>
    %c15_i32 = arith.constant 15 : i32
    %19 = vector.broadcast %c15_i32 : i32 to vector<32x1xi32>
    %20 = arith.cmpi ne, %16, %19 : vector<32x1xi32>
    %21 = tpu.iota {dimensions = array<i32: 0>} : vector<128x8xi32>
    %c8_i32 = arith.constant 8 : i32
    %c0_i32_4 = arith.constant 0 : i32
    %22 = arith.cmpi eq, %c8_i32, %c0_i32_4 : i32
    %c1_i32_5 = arith.constant 1 : i32
    %23 = arith.select %22, %c1_i32_5, %c8_i32 : i32
    %24 = vector.broadcast %23 : i32 to vector<128x8xi32>
    %25 = arith.remsi %21, %24 : vector<128x8xi32>
    %c0_i32_6 = arith.constant 0 : i32
    %26 = vector.broadcast %c0_i32_6 : i32 to vector<128x8xi32>
    %27 = arith.cmpi ne, %25, %26 : vector<128x8xi32>
    %c0_i32_7 = arith.constant 0 : i32
    %28 = vector.broadcast %c0_i32_7 : i32 to vector<128x8xi32>
    %29 = arith.cmpi slt, %25, %28 : vector<128x8xi32>
    %c0_i32_8 = arith.constant 0 : i32
    %30 = arith.cmpi slt, %23, %c0_i32_8 : i32
    %31 = vector.broadcast %30 : i1 to vector<128x8xi1>
    %32 = vector.broadcast %31 : vector<128x8xi1> to vector<128x8xi1>
    %33 = arith.xori %29, %32 : vector<128x8xi1>
    %34 = arith.andi %33, %27 : vector<128x8xi1>
    %35 = vector.broadcast %23 : i32 to vector<128x8xi32>
    %36 = arith.addi %25, %35 : vector<128x8xi32>
    %37 = arith.select %34, %36, %25 : vector<128x8xi1>, vector<128x8xi32>
    %38 = tpu.iota {dimensions = array<i32: 1>} : vector<128x8xi32>
    %39 = arith.cmpi eq, %37, %38 : vector<128x8xi32>
    %40 = arith.extui %39 : vector<128x8xi1> to vector<128x8xi32>
    %41 = arith.sitofp %40 : vector<128x8xi32> to vector<128x8xf32>
    %42 = tpu.iota {dimensions = array<i32: 0>} : vector<8x128xi32>
    %43 = tpu.iota {dimensions = array<i32: 1>} : vector<8x128xi32>
    %c8_i32_9 = arith.constant 8 : i32
    %c0_i32_10 = arith.constant 0 : i32
    %44 = arith.cmpi eq, %c8_i32_9, %c0_i32_10 : i32
    %c1_i32_11 = arith.constant 1 : i32
    %45 = arith.select %44, %c1_i32_11, %c8_i32_9 : i32
    %46 = vector.broadcast %45 : i32 to vector<8x128xi32>
    %47 = arith.remsi %43, %46 : vector<8x128xi32>
    %c0_i32_12 = arith.constant 0 : i32
    %48 = vector.broadcast %c0_i32_12 : i32 to vector<8x128xi32>
    %49 = arith.cmpi ne, %47, %48 : vector<8x128xi32>
    %c0_i32_13 = arith.constant 0 : i32
    %50 = vector.broadcast %c0_i32_13 : i32 to vector<8x128xi32>
    %51 = arith.cmpi slt, %47, %50 : vector<8x128xi32>
    %c0_i32_14 = arith.constant 0 : i32
    %52 = arith.cmpi slt, %45, %c0_i32_14 : i32
    %53 = vector.broadcast %52 : i1 to vector<8x128xi1>
    %54 = vector.broadcast %53 : vector<8x128xi1> to vector<8x128xi1>
    %55 = arith.xori %51, %54 : vector<8x128xi1>
    %56 = arith.andi %55, %49 : vector<8x128xi1>
    %57 = vector.broadcast %45 : i32 to vector<8x128xi32>
    %58 = arith.addi %47, %57 : vector<8x128xi32>
    %59 = arith.select %56, %58, %47 : vector<8x128xi1>, vector<8x128xi32>
    %60 = arith.cmpi eq, %42, %59 : vector<8x128xi32>
    %61 = arith.extui %60 : vector<8x128xi1> to vector<8x128xi32>
    %62 = arith.sitofp %61 : vector<8x128xi32> to vector<8x128xf32>
    %c0 = arith.constant 0 : index
    %c0_15 = arith.constant 0 : index
    %63 = vector.load %arg0[%c0, %c0_15] : memref<32x64xf32, #tpu.memory_space<vmem>>, vector<32x64xf32>
    %c0_16 = arith.constant 0 : index
    %c0_17 = arith.constant 0 : index
    %64 = vector.load %arg2[%c0_16, %c0_17] : memref<1x128xf32, #tpu.memory_space<vmem>>, vector<1x128xf32>
    %c1_i32_18 = arith.constant 1 : i32
    %65 = tpu.dynamic_rotate %63 by %c1_i32_18 dim 0 : vector<32x64xf32>, i32 -> vector<32x64xf32>
    %cst = arith.constant 0.000000e+00 : f32
    %66 = vector.shape_cast %18 : vector<32x1xi1> to vector<32x1xi1>
    %67 = vector.broadcast %66 : vector<32x1xi1> to vector<32x64xi1>
    %68 = vector.broadcast %cst : f32 to vector<32x64xf32>
    %69 = arith.select %67, %65, %68 : vector<32x64xi1>, vector<32x64xf32>
    %c31_i32 = arith.constant 31 : i32
    %70 = tpu.dynamic_rotate %63 by %c31_i32 dim 0 : vector<32x64xf32>, i32 -> vector<32x64xf32>
    %cst_19 = arith.constant 0.000000e+00 : f32
    %71 = vector.shape_cast %20 : vector<32x1xi1> to vector<32x1xi1>
    %72 = vector.broadcast %71 : vector<32x1xi1> to vector<32x64xi1>
    %73 = vector.broadcast %cst_19 : f32 to vector<32x64xf32>
    %74 = arith.select %72, %70, %73 : vector<32x64xi1>, vector<32x64xf32>
    %c0_20 = arith.constant 0 : index
    %c0_21 = arith.constant 0 : index
    %c0_22 = arith.constant 0 : index
    %75 = vector.load %arg1[%c0_20, %c0_21, %c0_22] : memref<3x64x128xf32, #tpu.memory_space<vmem>>, vector<1x64x128xf32>
    %76 = vector.shape_cast %75 : vector<1x64x128xf32> to vector<64x128xf32>
    %cst_23 = arith.constant dense<0.000000e+00> : vector<32x128xf32>
    %77 = tpu.matmul %69, %76, %cst_23 {dimension_numbers = #tpu.dot_dimension_numbers<[1], [0], [0], [1], [0, 0, 1, 1], [], []>} : vector<32x64xf32>, vector<64x128xf32>, vector<32x128xf32> -> vector<32x128xf32>
    %c1 = arith.constant 1 : index
    %c0_24 = arith.constant 0 : index
    %c0_25 = arith.constant 0 : index
    %78 = vector.load %arg1[%c1, %c0_24, %c0_25] : memref<3x64x128xf32, #tpu.memory_space<vmem>>, vector<1x64x128xf32>
    %79 = vector.shape_cast %78 : vector<1x64x128xf32> to vector<64x128xf32>
    %cst_26 = arith.constant dense<0.000000e+00> : vector<32x128xf32>
    %80 = tpu.matmul %63, %79, %cst_26 {dimension_numbers = #tpu.dot_dimension_numbers<[1], [0], [0], [1], [0, 0, 1, 1], [], []>} : vector<32x64xf32>, vector<64x128xf32>, vector<32x128xf32> -> vector<32x128xf32>
    %81 = arith.addf %77, %80 : vector<32x128xf32>
    %c2 = arith.constant 2 : index
    %c0_27 = arith.constant 0 : index
    %c0_28 = arith.constant 0 : index
    %82 = vector.load %arg1[%c2, %c0_27, %c0_28] : memref<3x64x128xf32, #tpu.memory_space<vmem>>, vector<1x64x128xf32>
    %83 = vector.shape_cast %82 : vector<1x64x128xf32> to vector<64x128xf32>
    %cst_29 = arith.constant dense<0.000000e+00> : vector<32x128xf32>
    %84 = tpu.matmul %74, %83, %cst_29 {dimension_numbers = #tpu.dot_dimension_numbers<[1], [0], [0], [1], [0, 0, 1, 1], [], []>} : vector<32x64xf32>, vector<64x128xf32>, vector<32x128xf32> -> vector<32x128xf32>
    %85 = arith.addf %81, %84 : vector<32x128xf32>
    %86 = vector.broadcast %64 : vector<1x128xf32> to vector<32x128xf32>
    %87 = arith.addf %85, %86 : vector<32x128xf32>
    %cst_30 = arith.constant 0.000000e+00 : f32
    %88 = vector.broadcast %cst_30 : f32 to vector<32x128xf32>
    %89 = arith.maximumf %87, %88 : vector<32x128xf32>
    %c0_31 = arith.constant 0 : index
    %c0_32 = arith.constant 0 : index
    %90 = vector.load %arg3[%c0_31, %c0_32] : memref<1x128xf32, #tpu.memory_space<vmem>>, vector<1x128xf32>
    %c0_33 = arith.constant 0 : index
    %c0_34 = arith.constant 0 : index
    %91 = vector.load %arg4[%c0_33, %c0_34] : memref<1x128xf32, #tpu.memory_space<vmem>>, vector<1x128xf32>
    %cst_35 = arith.constant dense<0.000000e+00> : vector<128xf32>
    %92 = vector.multi_reduction <add>, %89, %cst_35 [0] : vector<32x128xf32> to vector<128xf32>
    %93 = vector.shape_cast %92 : vector<128xf32> to vector<1x128xf32>
    %94 = arith.mulf %89, %89 : vector<32x128xf32>
    %cst_36 = arith.constant dense<0.000000e+00> : vector<128xf32>
    %95 = vector.multi_reduction <add>, %94, %cst_36 [0] : vector<32x128xf32> to vector<128xf32>
    %96 = vector.shape_cast %95 : vector<128xf32> to vector<1x128xf32>
    %97 = tpu.concatenate %93, %96 in 0 : vector<1x128xf32>, vector<1x128xf32> -> vector<2x128xf32>
    %cst_37 = arith.constant dense<0.000000e+00> : vector<2x8xf32>
    %98 = tpu.matmul %97, %41, %cst_37 {dimension_numbers = #tpu.dot_dimension_numbers<[1], [0], [0], [1], [0, 0, 1, 1], [], []>} : vector<2x128xf32>, vector<128x8xf32>, vector<2x8xf32> -> vector<2x8xf32>
    %99 = vector.extract_strided_slice %98 {offsets = [0, 0], sizes = [1, 8], strides = [1, 1]} : vector<2x8xf32> to vector<1x8xf32>
    %cst_38 = arith.constant 0.001953125 : f32
    %100 = vector.broadcast %cst_38 : f32 to vector<1x8xf32>
    %101 = arith.mulf %99, %100 : vector<1x8xf32>
    %102 = vector.extract_strided_slice %98 {offsets = [1, 0], sizes = [1, 8], strides = [1, 1]} : vector<2x8xf32> to vector<1x8xf32>
    %cst_39 = arith.constant 0.001953125 : f32
    %103 = vector.broadcast %cst_39 : f32 to vector<1x8xf32>
    %104 = arith.mulf %102, %103 : vector<1x8xf32>
    %105 = arith.mulf %101, %101 : vector<1x8xf32>
    %106 = arith.subf %104, %105 : vector<1x8xf32>
    %cst_40 = arith.constant 9.99999974E-6 : f32
    %107 = vector.broadcast %cst_40 : f32 to vector<1x8xf32>
    %108 = arith.addf %106, %107 : vector<1x8xf32>
    %109 = math.rsqrt %108 : vector<1x8xf32>
    %110 = tpu.concatenate %101, %109 in 0 : vector<1x8xf32>, vector<1x8xf32> -> vector<2x8xf32>
    %cst_41 = arith.constant dense<0.000000e+00> : vector<2x128xf32>
    %111 = tpu.matmul %110, %62, %cst_41 {dimension_numbers = #tpu.dot_dimension_numbers<[1], [0], [0], [1], [0, 0, 1, 1], [], []>} : vector<2x8xf32>, vector<8x128xf32>, vector<2x128xf32> -> vector<2x128xf32>
    %112 = vector.extract_strided_slice %111 {offsets = [1, 0], sizes = [1, 128], strides = [1, 1]} : vector<2x128xf32> to vector<1x128xf32>
    %113 = arith.mulf %112, %90 : vector<1x128xf32>
    %114 = vector.extract_strided_slice %111 {offsets = [0, 0], sizes = [1, 128], strides = [1, 1]} : vector<2x128xf32> to vector<1x128xf32>
    %115 = arith.mulf %114, %113 : vector<1x128xf32>
    %116 = arith.subf %91, %115 : vector<1x128xf32>
    %117 = vector.broadcast %113 : vector<1x128xf32> to vector<32x128xf32>
    %118 = arith.mulf %89, %117 : vector<32x128xf32>
    %119 = vector.broadcast %116 : vector<1x128xf32> to vector<32x128xf32>
    %120 = arith.addf %118, %119 : vector<32x128xf32>
    %c0_42 = arith.constant 0 : index
    %c0_43 = arith.constant 0 : index
    %121 = vector.load %arg6[%c0_42, %c0_43] : memref<1x128xf32, #tpu.memory_space<vmem>>, vector<1x128xf32>
    %c1_i32_44 = arith.constant 1 : i32
    %122 = tpu.dynamic_rotate %120 by %c1_i32_44 dim 0 : vector<32x128xf32>, i32 -> vector<32x128xf32>
    %cst_45 = arith.constant 0.000000e+00 : f32
    %123 = vector.shape_cast %18 : vector<32x1xi1> to vector<32x1xi1>
    %124 = vector.broadcast %123 : vector<32x1xi1> to vector<32x128xi1>
    %125 = vector.broadcast %cst_45 : f32 to vector<32x128xf32>
    %126 = arith.select %124, %122, %125 : vector<32x128xi1>, vector<32x128xf32>
    %c31_i32_46 = arith.constant 31 : i32
    %127 = tpu.dynamic_rotate %120 by %c31_i32_46 dim 0 : vector<32x128xf32>, i32 -> vector<32x128xf32>
    %cst_47 = arith.constant 0.000000e+00 : f32
    %128 = vector.shape_cast %20 : vector<32x1xi1> to vector<32x1xi1>
    %129 = vector.broadcast %128 : vector<32x1xi1> to vector<32x128xi1>
    %130 = vector.broadcast %cst_47 : f32 to vector<32x128xf32>
    %131 = arith.select %129, %127, %130 : vector<32x128xi1>, vector<32x128xf32>
    %c0_48 = arith.constant 0 : index
    %c0_49 = arith.constant 0 : index
    %c0_50 = arith.constant 0 : index
    %132 = vector.load %arg5[%c0_48, %c0_49, %c0_50] : memref<3x128x128xf32, #tpu.memory_space<vmem>>, vector<1x128x128xf32>
    %133 = vector.shape_cast %132 : vector<1x128x128xf32> to vector<128x128xf32>
    %cst_51 = arith.constant dense<0.000000e+00> : vector<32x128xf32>
    %134 = tpu.matmul %126, %133, %cst_51 {dimension_numbers = #tpu.dot_dimension_numbers<[1], [0], [0], [1], [0, 0, 1, 1], [], []>} : vector<32x128xf32>, vector<128x128xf32>, vector<32x128xf32> -> vector<32x128xf32>
    %c1_52 = arith.constant 1 : index
    %c0_53 = arith.constant 0 : index
    %c0_54 = arith.constant 0 : index
    %135 = vector.load %arg5[%c1_52, %c0_53, %c0_54] : memref<3x128x128xf32, #tpu.memory_space<vmem>>, vector<1x128x128xf32>
    %136 = vector.shape_cast %135 : vector<1x128x128xf32> to vector<128x128xf32>
    %cst_55 = arith.constant dense<0.000000e+00> : vector<32x128xf32>
    %137 = tpu.matmul %120, %136, %cst_55 {dimension_numbers = #tpu.dot_dimension_numbers<[1], [0], [0], [1], [0, 0, 1, 1], [], []>} : vector<32x128xf32>, vector<128x128xf32>, vector<32x128xf32> -> vector<32x128xf32>
    %138 = arith.addf %134, %137 : vector<32x128xf32>
    %c2_56 = arith.constant 2 : index
    %c0_57 = arith.constant 0 : index
    %c0_58 = arith.constant 0 : index
    %139 = vector.load %arg5[%c2_56, %c0_57, %c0_58] : memref<3x128x128xf32, #tpu.memory_space<vmem>>, vector<1x128x128xf32>
    %140 = vector.shape_cast %139 : vector<1x128x128xf32> to vector<128x128xf32>
    %cst_59 = arith.constant dense<0.000000e+00> : vector<32x128xf32>
    %141 = tpu.matmul %131, %140, %cst_59 {dimension_numbers = #tpu.dot_dimension_numbers<[1], [0], [0], [1], [0, 0, 1, 1], [], []>} : vector<32x128xf32>, vector<128x128xf32>, vector<32x128xf32> -> vector<32x128xf32>
    %142 = arith.addf %138, %141 : vector<32x128xf32>
    %143 = vector.broadcast %121 : vector<1x128xf32> to vector<32x128xf32>
    %144 = arith.addf %142, %143 : vector<32x128xf32>
    %cst_60 = arith.constant 0.000000e+00 : f32
    %145 = vector.broadcast %cst_60 : f32 to vector<32x128xf32>
    %146 = arith.maximumf %144, %145 : vector<32x128xf32>
    %c0_61 = arith.constant 0 : index
    %c0_62 = arith.constant 0 : index
    %147 = vector.load %arg7[%c0_61, %c0_62] : memref<1x128xf32, #tpu.memory_space<vmem>>, vector<1x128xf32>
    %c0_63 = arith.constant 0 : index
    %c0_64 = arith.constant 0 : index
    %148 = vector.load %arg8[%c0_63, %c0_64] : memref<1x128xf32, #tpu.memory_space<vmem>>, vector<1x128xf32>
    %cst_65 = arith.constant dense<0.000000e+00> : vector<128xf32>
    %149 = vector.multi_reduction <add>, %146, %cst_65 [0] : vector<32x128xf32> to vector<128xf32>
    %150 = vector.shape_cast %149 : vector<128xf32> to vector<1x128xf32>
    %151 = arith.mulf %146, %146 : vector<32x128xf32>
    %cst_66 = arith.constant dense<0.000000e+00> : vector<128xf32>
    %152 = vector.multi_reduction <add>, %151, %cst_66 [0] : vector<32x128xf32> to vector<128xf32>
    %153 = vector.shape_cast %152 : vector<128xf32> to vector<1x128xf32>
    %154 = tpu.concatenate %150, %153 in 0 : vector<1x128xf32>, vector<1x128xf32> -> vector<2x128xf32>
    %cst_67 = arith.constant dense<0.000000e+00> : vector<2x8xf32>
    %155 = tpu.matmul %154, %41, %cst_67 {dimension_numbers = #tpu.dot_dimension_numbers<[1], [0], [0], [1], [0, 0, 1, 1], [], []>} : vector<2x128xf32>, vector<128x8xf32>, vector<2x8xf32> -> vector<2x8xf32>
    %156 = vector.extract_strided_slice %155 {offsets = [0, 0], sizes = [1, 8], strides = [1, 1]} : vector<2x8xf32> to vector<1x8xf32>
    %cst_68 = arith.constant 0.001953125 : f32
    %157 = vector.broadcast %cst_68 : f32 to vector<1x8xf32>
    %158 = arith.mulf %156, %157 : vector<1x8xf32>
    %159 = vector.extract_strided_slice %155 {offsets = [1, 0], sizes = [1, 8], strides = [1, 1]} : vector<2x8xf32> to vector<1x8xf32>
    %cst_69 = arith.constant 0.001953125 : f32
    %160 = vector.broadcast %cst_69 : f32 to vector<1x8xf32>
    %161 = arith.mulf %159, %160 : vector<1x8xf32>
    %162 = arith.mulf %158, %158 : vector<1x8xf32>
    %163 = arith.subf %161, %162 : vector<1x8xf32>
    %cst_70 = arith.constant 9.99999974E-6 : f32
    %164 = vector.broadcast %cst_70 : f32 to vector<1x8xf32>
    %165 = arith.addf %163, %164 : vector<1x8xf32>
    %166 = math.rsqrt %165 : vector<1x8xf32>
    %167 = tpu.concatenate %158, %166 in 0 : vector<1x8xf32>, vector<1x8xf32> -> vector<2x8xf32>
    %cst_71 = arith.constant dense<0.000000e+00> : vector<2x128xf32>
    %168 = tpu.matmul %167, %62, %cst_71 {dimension_numbers = #tpu.dot_dimension_numbers<[1], [0], [0], [1], [0, 0, 1, 1], [], []>} : vector<2x8xf32>, vector<8x128xf32>, vector<2x128xf32> -> vector<2x128xf32>
    %169 = vector.extract_strided_slice %168 {offsets = [1, 0], sizes = [1, 128], strides = [1, 1]} : vector<2x128xf32> to vector<1x128xf32>
    %170 = arith.mulf %169, %147 : vector<1x128xf32>
    %171 = vector.extract_strided_slice %168 {offsets = [0, 0], sizes = [1, 128], strides = [1, 1]} : vector<2x128xf32> to vector<1x128xf32>
    %172 = arith.mulf %171, %170 : vector<1x128xf32>
    %173 = arith.subf %148, %172 : vector<1x128xf32>
    %174 = vector.broadcast %170 : vector<1x128xf32> to vector<32x128xf32>
    %175 = arith.mulf %146, %174 : vector<32x128xf32>
    %176 = vector.broadcast %173 : vector<1x128xf32> to vector<32x128xf32>
    %177 = arith.addf %175, %176 : vector<32x128xf32>
    %c0_72 = arith.constant 0 : index
    %c0_73 = arith.constant 0 : index
    %178 = vector.load %arg9[%c0_72, %c0_73] : memref<32x128xf32, #tpu.memory_space<vmem>>, vector<32x128xf32>
    tpu.vector_store %arg9[%c0_72, %c0_73], %177 {strides = array<i32>} : memref<32x128xf32, #tpu.memory_space<vmem>>, vector<32x128xf32>,
    return
  }
}

</mosaic_0001>

<llo_original>
// kernel: tile.33
$region0: #{tile.33}
  #allocation0 [shape = 's32[1]{0}', space=sflag, size = 0x4, scoped, tag = 'scoped memory for tile.33']
  %s0 = inlined_call_operand.vmem [shape: f32[8], index: 0, kind: input, shape index: {}]
  %s1 = inlined_call_operand.vmem [shape: f32[16,8], index: 1, kind: output, shape index: {}]
  // Predicated region
  $region2: #{tile.33} parent=0 // pred_check
    _
  $region3: #{tile.33} parent=0 // pred_check_branch
    %3 = sbr.rel (0) target = $region5
  $region4: #{tile.33} parent=0 // pred_region
    _
  $region5: #{tile.33} parent=0 // pred_fallthru
    _
  %v4 = vld [vmem:[%s0] ss:$0 sm:$0xff]
  %5 = vst [vmem:[%s1] sm:$0xff] %v4
  %s6 = scalar_lea.vmem %s1, 8
  %7 = vst [vmem:[%s6] sm:$0xff] %v4

// kernel: tile.34
$region0: #{tile.34}
  %s0 = inlined_call_operand.vmem [shape: f32[16,8], index: 0, kind: input, shape index: {}]
  %s1 = inlined_call_operand.vmem [shape: f32[1,128], index: 1, kind: output, shape index: {}]
  $region1: #{tile.34} parent=0
    #allocation0 [shape = 'u8[4096]{0}', space=vmem, size = 0x1000, scoped, tag = 'scoped mem for output reshape']
    %v2 = vld [vmem:[%s0] sm:$0x1]
    %vm3 = vcmask 64512
    %4 = vst.msk [vmem:[#allocation0] sm:$0x1] %vm3, %v2
    %s5 = scalar_lea.vmem %s0, 15
    %v6 = vld [vmem:[%s5] sm:$0x1]
    %7 = vrot.lane.b32.xlu0 %v6, 120
    %v8 = vpop.permute.xlu0 %7
    %vm9 = vcmask 1048512
    %10 = vst.msk [vmem:[#allocation0] sm:$0x1] %vm9, %v8
    %s11 = scalar_lea.vmem %s0, 14
    %v12 = vld [vmem:[%s11] sm:$0x1]
    %13 = vrot.lane.b32.xlu0 %v12, 112
    %v14 = vpop.permute.xlu0 %13
    %vm15 = vcmask 982912
    %16 = vst.msk [vmem:[#allocation0] sm:$0x1] %vm15, %v14
    %s17 = scalar_lea.vmem %s0, 13
    %v18 = vld [vmem:[%s17] sm:$0x1]
    %19 = vrot.lane.b32.xlu0 %v18, 104
    %v20 = vpop.permute.xlu0 %19
    %vm21 = vcmask 917312
    %22 = vst.msk [vmem:[#allocation0] sm:$0x1] %vm21, %v20
    %s23 = scalar_lea.vmem %s0, 12
    %v24 = vld [vmem:[%s23] sm:$0x1]
    %25 = vrot.lane.b32.xlu0 %v24, 96
    %v26 = vpop.permute.xlu0 %25
    %vm27 = vcmask 851712
    %28 = vst.msk [vmem:[#allocation0] sm:$0x1] %vm27, %v26
    %s29 = scalar_lea.vmem %s0, 11
    %v30 = vld [vmem:[%s29] sm:$0x1]
    %31 = vrot.lane.b32.xlu0 %v30, 88
    %v32 = vpop.permute.xlu0 %31
    %vm33 = vcmask 786112
    %34 = vst.msk [vmem:[#allocation0] sm:$0x1] %vm33, %v32
    %s35 = scalar_lea.vmem %s0, 10
    %v36 = vld [vmem:[%s35] sm:$0x1]
    %37 = vrot.lane.b32.xlu0 %v36, 80
    %v38 = vpop.permute.xlu0 %37
    %vm39 = vcmask 720512
    %40 = vst.msk [vmem:[#allocation0] sm:$0x1] %vm39, %v38
    %s41 = scalar_lea.vmem %s0, 9
    %v42 = vld [vmem:[%s41] sm:$0x1]
    %43 = vrot.lane.b32.xlu0 %v42, 72
    %v44 = vpop.permute.xlu0 %43
    %vm45 = vcmask 654912
    %46 = vst.msk [vmem:[#allocation0] sm:$0x1] %vm45, %v44
    %s47 = scalar_lea.vmem %s0, 8
    %v48 = vld [vmem:[%s47] sm:$0x1]
    %49 = vrot.lane.b32.xlu0 %v48, 64
    %v50 = vpop.permute.xlu0 %49
    %vm51 = vcmask 589312
    %52 = vst.msk [vmem:[#allocation0] sm:$0x1] %vm51, %v50
    %s53 = scalar_lea.vmem %s0, 7
    %v54 = vld [vmem:[%s53] sm:$0x1]
    %55 = vrot.lane.b32.xlu0 %v54, 56
    %v56 = vpop.permute.xlu0 %55
    %vm57 = vcmask 523712
    %58 = vst.msk [vmem:[#allocation0] sm:$0x1] %vm57, %v56
    %s59 = scalar_lea.vmem %s0, 6
    %v60 = vld [vmem:[%s59] sm:$0x1]
    %61 = vrot.lane.b32.xlu0 %v60, 48
    %v62 = vpop.permute.xlu0 %61
    %vm63 = vcmask 458112
    %64 = vst.msk [vmem:[#allocation0] sm:$0x1] %vm63, %v62
    %s65 = scalar_lea.vmem %s0, 5
    %v66 = vld [vmem:[%s65] sm:$0x1]
    %67 = vrot.lane.b32.xlu0 %v66, 40
    %v68 = vpop.permute.xlu0 %67
    %vm69 = vcmask 392512
    %70 = vst.msk [vmem:[#allocation0] sm:$0x1] %vm69, %v68
    %s71 = scalar_lea.vmem %s0, 4
    %v72 = vld [vmem:[%s71] sm:$0x1]
    %73 = vrot.lane.b32.xlu0 %v72, 32
    %v74 = vpop.permute.xlu0 %73
    %vm75 = vcmask 326912
    %76 = vst.msk [vmem:[#allocation0] sm:$0x1] %vm75, %v74
    %s77 = scalar_lea.vmem %s0, 3
    %v78 = vld [vmem:[%s77] sm:$0x1]
    %79 = vrot.lane.b32.xlu0 %v78, 24
    %v80 = vpop.permute.xlu0 %79
    %vm81 = vcmask 261312
    %82 = vst.msk [vmem:[#allocation0] sm:$0x1] %vm81, %v80
    %s83 = scalar_lea.vmem %s0, 2
    %v84 = vld [vmem:[%s83] sm:$0x1]
    %85 = vrot.lane.b32.xlu0 %v84, 16
    %v86 = vpop.permute.xlu0 %85
    %vm87 = vcmask 195712
    %88 = vst.msk [vmem:[#allocation0] sm:$0x1] %vm87, %v86
    %s89 = scalar_lea.vmem %s0, 1
    %v90 = vld [vmem:[%s89] sm:$0x1]
    %91 = vrot.lane.b32.xlu0 %v90, 8
    %v92 = vpop.permute.xlu0 %91
    %vm93 = vcmask 130112
    %94 = vst.msk [vmem:[#allocation0] sm:$0x1] %vm93, %v92
    %s96 = sshllo.u32 0, 1
    %v98 = vld [vmem:[#allocation0] sm:%s96]
    %s99 = sshllo.u32 0, 1
    %100 = vst [vmem:[%s1] sm:%s99] %v98

// kernel: double_conv.1
$region0: #{double_conv.1}
  #allocation0 [shape = 'u32[]', space=smem, size = 0x4, offset = 0x4, fixed_abs, tag = 'smem constant byte address 0x4 - core index']
  #allocation1 [shape = 'u32[144,128]{1,0:T(1,128)}', space=vmem, size = 0x12000, scoped, tag = 'internal scratch']
  %s0 = inlined_call_operand.vmem [shape: f32[32,64], index: 0, kind: input, shape index: {}]
  %s1 = inlined_call_operand.vmem [shape: f32[3,64,128], index: 1, kind: input, shape index: {}]
  %s2 = inlined_call_operand.vmem [shape: f32[1,128], index: 2, kind: input, shape index: {}]
  %s3 = inlined_call_operand.vmem [shape: f32[1,128], index: 3, kind: input, shape index: {}]
  %s4 = inlined_call_operand.vmem [shape: f32[1,128], index: 4, kind: input, shape index: {}]
  %s5 = inlined_call_operand.vmem [shape: f32[3,128,128], index: 5, kind: input, shape index: {}]
  %s6 = inlined_call_operand.vmem [shape: f32[1,128], index: 6, kind: input, shape index: {}]
  %s7 = inlined_call_operand.vmem [shape: f32[1,128], index: 7, kind: input, shape index: {}]
  %s8 = inlined_call_operand.vmem [shape: f32[1,128], index: 8, kind: input, shape index: {}]
  %s9 = inlined_call_operand.vmem [shape: f32[32,128], index: 9, kind: output, shape index: {}]
  %s10 = sld [smem:[#allocation0]]
  $region46: #{double_conv.1} parent=0
    _
  %s12 = ssub.s32 1, %s10
  %s13 = scalar_select 0, %s12, %s10
  // Predicated region
  $region2: #{double_conv.1} parent=0 // pred_check
    _
  $region3: #{double_conv.1} parent=0 // pred_check_branch
    %15 = sbr.rel (0) target = $region5
  $region4: #{double_conv.1} parent=0 // pred_region
    _
  $region5: #{double_conv.1} parent=0 // pred_fallthru
    _
  // Predicated region
  $region6: #{double_conv.1} parent=0 // pred_check
    _
  $region7: #{double_conv.1} parent=0 // pred_check_branch
    %17 = sbr.rel (0) target = $region9
  $region8: #{double_conv.1} parent=0 // pred_region
    _
  $region9: #{double_conv.1} parent=0 // pred_fallthru
    _
  // Predicated region
  $region10: #{double_conv.1} parent=0 // pred_check
    _
  $region11: #{double_conv.1} parent=0 // pred_check_branch
    %19 = sbr.rel (0) target = $region13
  $region12: #{double_conv.1} parent=0 // pred_region
    _
  $region13: #{double_conv.1} parent=0 // pred_fallthru
    _
  // Predicated region
  $region14: #{double_conv.1} parent=0 // pred_check
    _
  $region15: #{double_conv.1} parent=0 // pred_check_branch
    %21 = sbr.rel (0) target = $region17
  $region16: #{double_conv.1} parent=0 // pred_region
    _
  $region17: #{double_conv.1} parent=0 // pred_fallthru
    _
  // Predicated region
  $region18: #{double_conv.1} parent=0 // pred_check
    _
  $region19: #{double_conv.1} parent=0 // pred_check_branch
    %23 = sbr.rel (0) target = $region21
  $region20: #{double_conv.1} parent=0 // pred_region
    _
  $region21: #{double_conv.1} parent=0 // pred_fallthru
    _
  // Predicated region
  $region22: #{double_conv.1} parent=0 // pred_check
    _
  $region23: #{double_conv.1} parent=0 // pred_check_branch
    %25 = sbr.rel (0) target = $region25
  $region24: #{double_conv.1} parent=0 // pred_region
    _
  $region25: #{double_conv.1} parent=0 // pred_fallthru
    _
  // Predicated region
  $region26: #{double_conv.1} parent=0 // pred_check
    _
  $region27: #{double_conv.1} parent=0 // pred_check_branch
    %27 = sbr.rel (0) target = $region29
  $region28: #{double_conv.1} parent=0 // pred_region
    _
  $region29: #{double_conv.1} parent=0 // pred_fallthru
    _
  // Predicated region
  $region30: #{double_conv.1} parent=0 // pred_check
    _
  $region31: #{double_conv.1} parent=0 // pred_check_branch
    %29 = sbr.rel (0) target = $region33
  $region32: #{double_conv.1} parent=0 // pred_region
    _
  $region33: #{double_conv.1} parent=0 // pred_fallthru
    _
  // Predicated region
  $region34: #{double_conv.1} parent=0 // pred_check
    _
  $region35: #{double_conv.1} parent=0 // pred_check_branch
    %31 = sbr.rel (0) target = $region37
  $region36: #{double_conv.1} parent=0 // pred_region
    _
  $region37: #{double_conv.1} parent=0 // pred_fallthru
    _
  %v32 = vlaneseq
  %v33 = vshrl.u32 %v32, 7
  %v34 = vadd.s32 %v33, 8
  %v35 = vadd.s32 %v33, 16
  %v36 = vadd.s32 %v33, 24
  %vm37 = vcmp.lt.s32.totalorder %v33, 0
  %v38 = vsub.s32 0, %v33
  %v39 = vsel %vm37, %v38, %v33
  %v40 = vshrl.u32 %v39, 4
  %v41 = vand.u32 %v39, 15
  %v42 = vsub.s32 0, %v41
  %v43 = vsel %vm37, %v42, %v41
  %vm44 = vcmp.lt.s32.totalorder %v34, 0
  %v45 = vsub.s32 0, %v34
  %v46 = vsel %vm44, %v45, %v34
  %v47 = vshrl.u32 %v46, 4
  %v48 = vand.u32 %v46, 15
  %v49 = vsub.s32 0, %v48
  %v50 = vsel %vm44, %v49, %v48
  %vm51 = vcmp.lt.s32.totalorder %v35, 0
  %v52 = vsub.s32 0, %v35
  %v53 = vsel %vm51, %v52, %v35
  %v54 = vshrl.u32 %v53, 4
  %v55 = vand.u32 %v53, 15
  %v56 = vsub.s32 0, %v55
  %v57 = vsel %vm51, %v56, %v55
  %vm58 = vcmp.lt.s32.totalorder %v36, 0
  %v59 = vsub.s32 0, %v36
  %v60 = vsel %vm58, %v59, %v36
  %v61 = vshrl.u32 %v60, 4
  %v62 = vand.u32 %v60, 15
  %v63 = vsub.s32 0, %v62
  %v64 = vsel %vm58, %v63, %v62
  %vm65 = vcmp.ne.s32.totalorder %v43, 0
  %vm66 = vcmp.ne.s32.totalorder %v50, 0
  %vm67 = vcmp.ne.s32.totalorder %v57, 0
  %vm68 = vcmp.ne.s32.totalorder %v64, 0
  %vm69 = vcmp.lt.s32.totalorder %v43, 0
  %vm70 = vcmp.lt.s32.totalorder %v50, 0
  %vm71 = vcmp.lt.s32.totalorder %v57, 0
  %vm72 = vcmp.lt.s32.totalorder %v64, 0
  %vm73 = vmand %vm69, %vm65
  %vm74 = vmand %vm70, %vm66
  %vm75 = vmand %vm71, %vm67
  %vm76 = vmand %vm72, %vm68
  %v77 = vadd.s32 %v43, 16
  %v78 = vadd.s32 %v50, 16
  %v79 = vadd.s32 %v57, 16
  %v80 = vadd.s32 %v64, 16
  %v81 = vsel %vm73, %v77, %v43
  %v82 = vsel %vm74, %v78, %v50
  %v83 = vsel %vm75, %v79, %v57
  %v84 = vsel %vm76, %v80, %v64
  %vm85 = vcmp.ne.s32.totalorder %v81, 0
  %vm86 = vcmp.ne.s32.totalorder %v82, 0
  %vm87 = vcmp.ne.s32.totalorder %v83, 0
  %vm88 = vcmp.ne.s32.totalorder %v84, 0
  %vm89 = vcmp.ne.s32.totalorder %v81, 15
  %vm90 = vcmp.ne.s32.totalorder %v82, 15
  %vm91 = vcmp.ne.s32.totalorder %v83, 15
  %vm92 = vcmp.ne.s32.totalorder %v84, 15
  %v93 = vadd.s32 %v33, 32
  %v94 = vadd.s32 %v33, 40
  %v95 = vadd.s32 %v33, 48
  %v96 = vadd.s32 %v33, 56
  %v97 = vadd.s32 %v33, 64
  %v98 = vadd.s32 %v33, 72
  %v99 = vadd.s32 %v33, 80
  %v100 = vadd.s32 %v33, 88
  %v101 = vadd.s32 %v33, 96
  %v102 = vadd.s32 %v33, 104
  %v103 = vadd.s32 %v33, 112
  %v104 = vadd.s32 %v33, 120
  %vm105 = vcmp.lt.s32.totalorder %v33, 0
  %v106 = vsub.s32 0, %v33
  %v107 = vsel %vm105, %v106, %v33
  %v108 = vshrl.u32 %v107, 3
  %v109 = vand.u32 %v107, 7
  %v110 = vsub.s32 0, %v109
  %v111 = vsel %vm105, %v110, %v109
  %vm112 = vcmp.lt.s32.totalorder %v34, 0
  %v113 = vsub.s32 0, %v34
  %v114 = vsel %vm112, %v113, %v34
  %v115 = vshrl.u32 %v114, 3
  %v116 = vand.u32 %v114, 7
  %v117 = vsub.s32 0, %v116
  %v118 = vsel %vm112, %v117, %v116
  %vm119 = vcmp.lt.s32.totalorder %v35, 0
  %v120 = vsub.s32 0, %v35
  %v121 = vsel %vm119, %v120, %v35
  %v122 = vshrl.u32 %v121, 3
  %v123 = vand.u32 %v121, 7
  %v124 = vsub.s32 0, %v123
  %v125 = vsel %vm119, %v124, %v123
  %vm126 = vcmp.lt.s32.totalorder %v36, 0
  %v127 = vsub.s32 0, %v36
  %v128 = vsel %vm126, %v127, %v36
  %v129 = vshrl.u32 %v128, 3
  %v130 = vand.u32 %v128, 7
  %v131 = vsub.s32 0, %v130
  %v132 = vsel %vm126, %v131, %v130
  %vm133 = vcmp.lt.s32.totalorder %v93, 0
  %v134 = vsub.s32 0, %v93
  %v135 = vsel %vm133, %v134, %v93
  %v136 = vshrl.u32 %v135, 3
  %v137 = vand.u32 %v135, 7
  %v138 = vsub.s32 0, %v137
  %v139 = vsel %vm133, %v138, %v137
  %vm140 = vcmp.lt.s32.totalorder %v94, 0
  %v141 = vsub.s32 0, %v94
  %v142 = vsel %vm140, %v141, %v94
  %v143 = vshrl.u32 %v142, 3
  %v144 = vand.u32 %v142, 7
  %v145 = vsub.s32 0, %v144
  %v146 = vsel %vm140, %v145, %v144
  %vm147 = vcmp.lt.s32.totalorder %v95, 0
  %v148 = vsub.s32 0, %v95
  %v149 = vsel %vm147, %v148, %v95
  %v150 = vshrl.u32 %v149, 3
  %v151 = vand.u32 %v149, 7
  %v152 = vsub.s32 0, %v151
  %v153 = vsel %vm147, %v152, %v151
  %vm154 = vcmp.lt.s32.totalorder %v96, 0
  %v155 = vsub.s32 0, %v96
  %v156 = vsel %vm154, %v155, %v96
  %v157 = vshrl.u32 %v156, 3
  %v158 = vand.u32 %v156, 7
  %v159 = vsub.s32 0, %v158
  %v160 = vsel %vm154, %v159, %v158
  %vm161 = vcmp.lt.s32.totalorder %v97, 0
  %v162 = vsub.s32 0, %v97
  %v163 = vsel %vm161, %v162, %v97
  %v164 = vshrl.u32 %v163, 3
  %v165 = vand.u32 %v163, 7
  %v166 = vsub.s32 0, %v165
  %v167 = vsel %vm161, %v166, %v165
  %vm168 = vcmp.lt.s32.totalorder %v98, 0
  %v169 = vsub.s32 0, %v98
  %v170 = vsel %vm168, %v169, %v98
  %v171 = vshrl.u32 %v170, 3
  %v172 = vand.u32 %v170, 7
  %v173 = vsub.s32 0, %v172
  %v174 = vsel %vm168, %v173, %v172
  %vm175 = vcmp.lt.s32.totalorder %v99, 0
  %v176 = vsub.s32 0, %v99
  %v177 = vsel %vm175, %v176, %v99
  %v178 = vshrl.u32 %v177, 3
  %v179 = vand.u32 %v177, 7
  %v180 = vsub.s32 0, %v179
  %v181 = vsel %vm175, %v180, %v179
  %vm182 = vcmp.lt.s32.totalorder %v100, 0
  %v183 = vsub.s32 0, %v100
  %v184 = vsel %vm182, %v183, %v100
  %v185 = vshrl.u32 %v184, 3
  %v186 = vand.u32 %v184, 7
  %v187 = vsub.s32 0, %v186
  %v188 = vsel %vm182, %v187, %v186
  %vm189 = vcmp.lt.s32.totalorder %v101, 0
  %v190 = vsub.s32 0, %v101
  %v191 = vsel %vm189, %v190, %v101
  %v192 = vshrl.u32 %v191, 3
  %v193 = vand.u32 %v191, 7
  %v194 = vsub.s32 0, %v193
  %v195 = vsel %vm189, %v194, %v193
  %vm196 = vcmp.lt.s32.totalorder %v102, 0
  %v197 = vsub.s32 0, %v102
  %v198 = vsel %vm196, %v197, %v102
  %v199 = vshrl.u32 %v198, 3
  %v200 = vand.u32 %v198, 7
  %v201 = vsub.s32 0, %v200
  %v202 = vsel %vm196, %v201, %v200
  %vm203 = vcmp.lt.s32.totalorder %v103, 0
  %v204 = vsub.s32 0, %v103
  %v205 = vsel %vm203, %v204, %v103
  %v206 = vshrl.u32 %v205, 3
  %v207 = vand.u32 %v205, 7
  %v208 = vsub.s32 0, %v207
  %v209 = vsel %vm203, %v208, %v207
  %vm210 = vcmp.lt.s32.totalorder %v104, 0
  %v211 = vsub.s32 0, %v104
  %v212 = vsel %vm210, %v211, %v104
  %v213 = vshrl.u32 %v212, 3
  %v214 = vand.u32 %v212, 7
  %v215 = vsub.s32 0, %v214
  %v216 = vsel %vm210, %v215, %v214
  %vm217 = vcmp.ne.s32.totalorder %v111, 0
  %vm218 = vcmp.ne.s32.totalorder %v118, 0
  %vm219 = vcmp.ne.s32.totalorder %v125, 0
  %vm220 = vcmp.ne.s32.totalorder %v132, 0
  %vm221 = vcmp.ne.s32.totalorder %v139, 0
  %vm222 = vcmp.ne.s32.totalorder %v146, 0
  %vm223 = vcmp.ne.s32.totalorder %v153, 0
  %vm224 = vcmp.ne.s32.totalorder %v160, 0
  %vm225 = vcmp.ne.s32.totalorder %v167, 0
  %vm226 = vcmp.ne.s32.totalorder %v174, 0
  %vm227 = vcmp.ne.s32.totalorder %v181, 0
  %vm228 = vcmp.ne.s32.totalorder %v188, 0
  %vm229 = vcmp.ne.s32.totalorder %v195, 0
  %vm230 = vcmp.ne.s32.totalorder %v202, 0
  %vm231 = vcmp.ne.s32.totalorder %v209, 0
  %vm232 = vcmp.ne.s32.totalorder %v216, 0
  %vm233 = vcmp.lt.s32.totalorder %v111, 0
  %vm234 = vcmp.lt.s32.totalorder %v118, 0
  %vm235 = vcmp.lt.s32.totalorder %v125, 0
  %vm236 = vcmp.lt.s32.totalorder %v132, 0
  %vm237 = vcmp.lt.s32.totalorder %v139, 0
  %vm238 = vcmp.lt.s32.totalorder %v146, 0
  %vm239 = vcmp.lt.s32.totalorder %v153, 0
  %vm240 = vcmp.lt.s32.totalorder %v160, 0
  %vm241 = vcmp.lt.s32.totalorder %v167, 0
  %vm242 = vcmp.lt.s32.totalorder %v174, 0
  %vm243 = vcmp.lt.s32.totalorder %v181, 0
  %vm244 = vcmp.lt.s32.totalorder %v188, 0
  %vm245 = vcmp.lt.s32.totalorder %v195, 0
  %vm246 = vcmp.lt.s32.totalorder %v202, 0
  %vm247 = vcmp.lt.s32.totalorder %v209, 0
  %vm248 = vcmp.lt.s32.totalorder %v216, 0
  %vm249 = vmand %vm233, %vm217
  %vm250 = vmand %vm234, %vm218
  %vm251 = vmand %vm235, %vm219
  %vm252 = vmand %vm236, %vm220
  %vm253 = vmand %vm237, %vm221
  %vm254 = vmand %vm238, %vm222
  %vm255 = vmand %vm239, %vm223
  %vm256 = vmand %vm240, %vm224
  %vm257 = vmand %vm241, %vm225
  %vm258 = vmand %vm242, %vm226
  %vm259 = vmand %vm243, %vm227
  %vm260 = vmand %vm244, %vm228
  %vm261 = vmand %vm245, %vm229
  %vm262 = vmand %vm246, %vm230
  %vm263 = vmand %vm247, %vm231
  %vm264 = vmand %vm248, %vm232
  %v265 = vadd.s32 %v111, 8
  %v266 = vadd.s32 %v118, 8
  %v267 = vadd.s32 %v125, 8
  %v268 = vadd.s32 %v132, 8
  %v269 = vadd.s32 %v139, 8
  %v270 = vadd.s32 %v146, 8
  %v271 = vadd.s32 %v153, 8
  %v272 = vadd.s32 %v160, 8
  %v273 = vadd.s32 %v167, 8
  %v274 = vadd.s32 %v174, 8
  %v275 = vadd.s32 %v181, 8
  %v276 = vadd.s32 %v188, 8
  %v277 = vadd.s32 %v195, 8
  %v278 = vadd.s32 %v202, 8
  %v279 = vadd.s32 %v209, 8
  %v280 = vadd.s32 %v216, 8
  %v281 = vsel %vm249, %v265, %v111
  %v282 = vsel %vm250, %v266, %v118
  %v283 = vsel %vm251, %v267, %v125
  %v284 = vsel %vm252, %v268, %v132
  %v285 = vsel %vm253, %v269, %v139
  %v286 = vsel %vm254, %v270, %v146
  %v287 = vsel %vm255, %v271, %v153
  %v288 = vsel %vm256, %v272, %v160
  %v289 = vsel %vm257, %v273, %v167
  %v290 = vsel %vm258, %v274, %v174
  %v291 = vsel %vm259, %v275, %v181
  %v292 = vsel %vm260, %v276, %v188
  %v293 = vsel %vm261, %v277, %v195
  %v294 = vsel %vm262, %v278, %v202
  %v295 = vsel %vm263, %v279, %v209
  %v296 = vsel %vm264, %v280, %v216
  %v297 = vlaneseq
  %v298 = vand.u32 %v297, 127
  %vm299 = vcmp.eq.s32.totalorder %v281, %v298
  %vm300 = vcmp.eq.s32.totalorder %v282, %v298
  %vm301 = vcmp.eq.s32.totalorder %v283, %v298
  %vm302 = vcmp.eq.s32.totalorder %v284, %v298
  %vm303 = vcmp.eq.s32.totalorder %v285, %v298
  %vm304 = vcmp.eq.s32.totalorder %v286, %v298
  %vm305 = vcmp.eq.s32.totalorder %v287, %v298
  %vm306 = vcmp.eq.s32.totalorder %v288, %v298
  %vm307 = vcmp.eq.s32.totalorder %v289, %v298
  %vm308 = vcmp.eq.s32.totalorder %v290, %v298
  %vm309 = vcmp.eq.s32.totalorder %v291, %v298
  %vm310 = vcmp.eq.s32.totalorder %v292, %v298
  %vm311 = vcmp.eq.s32.totalorder %v293, %v298
  %vm312 = vcmp.eq.s32.totalorder %v294, %v298
  %vm313 = vcmp.eq.s32.totalorder %v295, %v298
  %vm314 = vcmp.eq.s32.totalorder %v296, %v298
  %v315 = vsel %vm299, 1, 0
  %v316 = vsel %vm300, 1, 0
  %v317 = vsel %vm301, 1, 0
  %v318 = vsel %vm302, 1, 0
  %v319 = vsel %vm303, 1, 0
  %v320 = vsel %vm304, 1, 0
  %v321 = vsel %vm305, 1, 0
  %v322 = vsel %vm306, 1, 0
  %v323 = vsel %vm307, 1, 0
  %v324 = vsel %vm308, 1, 0
  %v325 = vsel %vm309, 1, 0
  %v326 = vsel %vm310, 1, 0
  %v327 = vsel %vm311, 1, 0
  %v328 = vsel %vm312, 1, 0
  %v329 = vsel %vm313, 1, 0
  %v330 = vsel %vm314, 1, 0
  %v331 = vcvt.s32.f32 %v315
  %v332 = vcvt.s32.f32 %v316
  %v333 = vcvt.s32.f32 %v317
  %v334 = vcvt.s32.f32 %v318
  %v335 = vcvt.s32.f32 %v319
  %v336 = vcvt.s32.f32 %v320
  %v337 = vcvt.s32.f32 %v321
  %v338 = vcvt.s32.f32 %v322
  %v339 = vcvt.s32.f32 %v323
  %v340 = vcvt.s32.f32 %v324
  %v341 = vcvt.s32.f32 %v325
  %v342 = vcvt.s32.f32 %v326
  %v343 = vcvt.s32.f32 %v327
  %v344 = vcvt.s32.f32 %v328
  %v345 = vcvt.s32.f32 %v329
  %v346 = vcvt.s32.f32 %v330
  %vm347 = vcmp.lt.s32.totalorder %v298, 0
  %v348 = vsub.s32 0, %v298
  %v349 = vsel %vm347, %v348, %v298
  %v350 = vshrl.u32 %v349, 3
  %v351 = vand.u32 %v349, 7
  %v352 = vsub.s32 0, %v351
  %v353 = vsel %vm347, %v352, %v351
  %vm354 = vcmp.ne.s32.totalorder %v353, 0
  %vm355 = vcmp.lt.s32.totalorder %v353, 0
  %vm356 = vmand %vm355, %vm354
  %v357 = vadd.s32 %v353, 8
  %v358 = vsel %vm356, %v357, %v353
  %vm359 = vcmp.eq.s32.totalorder %v33, %v358
  %v360 = vsel %vm359, 1, 0
  %v361 = vcvt.s32.f32 %v360
  %v362 = vld [vmem:[%s0] sm:$0xff]
  %v363 = vld [vmem:[%s0 + $0x8] sm:$0xff]
  %v364 = vld [vmem:[%s0 + $0x10] sm:$0xff]
  %v365 = vld [vmem:[%s0 + $0x18] sm:$0xff]
  %v366 = vld [vmem:[%s2] sm:$0x1]
  %v367 = vrot.slane %v362, 7
  %v368 = vrot.slane %v363, 7
  %v369 = vrot.slane %v364, 7
  %v370 = vrot.slane %v365, 7
  %vm371 = vcmp.lt.s32.totalorder %v33, 1
  %v372 = vsel %vm371, %v369, %v370
  %v373 = vsel %vm371, %v368, %v369
  %v374 = vsel %vm371, %v367, %v368
  %v375 = vsel %vm371, %v370, %v367
  %v376 = vsel %vm85, 1, 0
  %v377 = vsel %vm86, 1, 0
  %v378 = vsel %vm87, 1, 0
  %v379 = vsel %vm88, 1, 0
  %vm380 = vcmp.eq.s32.totalorder %v376, 1
  %vm381 = vcmp.eq.s32.totalorder %v377, 1
  %vm382 = vcmp.eq.s32.totalorder %v378, 1
  %vm383 = vcmp.eq.s32.totalorder %v379, 1
  %v384 = vsel %vm380, %v375, 0.0
  %v385 = vsel %vm381, %v374, 0.0
  %v386 = vsel %vm382, %v373, 0.0
  %v387 = vsel %vm383, %v372, 0.0
  %v388 = vrot.slane %v362, 1
  %v389 = vrot.slane %v363, 1
  %v390 = vrot.slane %v364, 1
  %v391 = vrot.slane %v365, 1
  %vm392 = vcmp.lt.s32.totalorder %v33, 7
  %v393 = vsel %vm392, %v390, %v391
  %v394 = vsel %vm392, %v389, %v390
  %v395 = vsel %vm392, %v388, %v389
  %v396 = vsel %vm392, %v391, %v388
  %v397 = vsel %vm89, 1, 0
  %v398 = vsel %vm90, 1, 0
  %v399 = vsel %vm91, 1, 0
  %v400 = vsel %vm92, 1, 0
  %vm401 = vcmp.eq.s32.totalorder %v397, 1
  %vm402 = vcmp.eq.s32.totalorder %v398, 1
  %vm403 = vcmp.eq.s32.totalorder %v399, 1
  %vm404 = vcmp.eq.s32.totalorder %v400, 1
  %v405 = vsel %vm401, %v395, 0.0
  %v406 = vsel %vm402, %v394, 0.0
  %v407 = vsel %vm403, %v393, 0.0
  %v408 = vsel %vm404, %v396, 0.0
  %v409 = vld [vmem:[%s1] sm:$0xff]
  %v410 = vld [vmem:[%s1 + $0x8] sm:$0xff]
  %v411 = vld [vmem:[%s1 + $0x10] sm:$0xff]
  %v412 = vld [vmem:[%s1 + $0x18] sm:$0xff]
  %v413 = vld [vmem:[%s1 + $0x20] sm:$0xff]
  %v414 = vld [vmem:[%s1 + $0x28] sm:$0xff]
  %v415 = vld [vmem:[%s1 + $0x30] sm:$0xff]
  %v416 = vld [vmem:[%s1 + $0x38] sm:$0xff]
  %s417 = scalar_lea.vmem %s1, 64
  %v418 = vld [vmem:[%s417] sm:$0xff]
  %v419 = vld [vmem:[%s417 + $0x8] sm:$0xff]
  %v420 = vld [vmem:[%s417 + $0x10] sm:$0xff]
  %v421 = vld [vmem:[%s417 + $0x18] sm:$0xff]
  %v422 = vld [vmem:[%s417 + $0x20] sm:$0xff]
  %v423 = vld [vmem:[%s417 + $0x28] sm:$0xff]
  %v424 = vld [vmem:[%s417 + $0x30] sm:$0xff]
  %v425 = vld [vmem:[%s417 + $0x38] sm:$0xff]
  %vm426 = vcmask 523264
  %v428 = vsel %vm426, %v362, 0
  %v431 = vsel %vm426, %v363, 0
  %v434 = vsel %vm426, %v364, 0
  %v437 = vsel %vm426, %v365, 0
  %439 = vmatprep.subr.mxu0 0.0
  %440 = vmatpush1.msra.mxu0 %v418
  %441 = vmatprep.subr.mxu0 0.0
  %442 = vmatpush1.msra.mxu0 %v419
  %443 = vmatprep.subr.mxu0 0.0
  %444 = vmatpush1.msra.mxu0 %v420
  %445 = vmatprep.subr.mxu0 0.0
  %446 = vmatpush1.msra.mxu0 %v421
  %447 = vmatprep.subr.mxu0 0.0
  %448 = vmatpush1.msra.mxu0 %v422
  %449 = vmatprep.subr.mxu0 0.0
  %450 = vmatpush1.msra.mxu0 %v423
  %451 = vmatprep.subr.mxu0 0.0
  %452 = vmatpush1.msra.mxu0 %v424
  %453 = vmatprep.subr.mxu0 0.0
  %454 = vmatpush1.msra.mxu0 %v425
  %455 = vmatprep.subr.mxu0 0.0
  %456 = vmatpush1.msra.mxu0 0.0
  %457 = vmatprep.subr.mxu0 0.0
  %458 = vmatpush1.msra.mxu0 0.0
  %459 = vmatprep.subr.mxu0 0.0
  %460 = vmatpush1.msra.mxu0 0.0
  %461 = vmatprep.subr.mxu0 0.0
  %462 = vmatpush1.msra.mxu0 0.0
  %463 = vmatprep.subr.mxu0 0.0
  %464 = vmatpush1.msra.mxu0 0.0
  %465 = vmatprep.subr.mxu0 0.0
  %466 = vmatpush1.msra.mxu0 0.0
  %467 = vmatprep.subr.mxu0 0.0
  %468 = vmatpush1.msra.mxu0 0.0
  %469 = vmatprep.subr.mxu0 0.0
  %470 = vmatpush1.msra.mxu0 0.0
  %471 = vmatprep.subr.mxu0 0.0
  %472 = vmatpush1.msra.mxu0 0.0
  %473 = vmatprep.subr.mxu0 0.0
  %474 = vmatpush1.msra.mxu0 0.0
  %475 = vmatprep.subr.mxu0 0.0
  %476 = vmatpush1.msra.mxu0 0.0
  %477 = vmatprep.subr.mxu0 0.0
  %478 = vmatpush1.msra.mxu0 0.0
  %479 = vmatprep.subr.mxu0 0.0
  %480 = vmatpush1.msra.mxu0 0.0
  %481 = vmatprep.subr.mxu0 0.0
  %482 = vmatpush1.msra.mxu0 0.0
  %483 = vmatprep.subr.mxu0 0.0
  %484 = vmatpush1.msra.mxu0 0.0
  %485 = vmatprep.subr.mxu0 0.0
  %486 = vmatpush1.msra.mxu0 0.0
  %487 = vmatprep.subr.mxu0 0.0
  %488 = vmatpush1.msra.mxu0 0.0
  %489 = vmatprep.subr.mxu0 0.0
  %490 = vmatpush1.msra.mxu0 0.0
  %491 = vmatprep.subr.mxu0 0.0
  %492 = vmatpush1.msra.mxu0 0.0
  %493 = vmatprep.subr.mxu0 0.0
  %494 = vmatpush1.msra.mxu0 0.0
  %495 = vmatprep.subr.mxu0 0.0
  %496 = vmatpush1.msra.mxu0 0.0
  %497 = vmatprep.subr.mxu0 0.0
  %498 = vmatpush1.msra.mxu0 0.0
  %499 = vmatprep.subr.mxu0 0.0
  %500 = vmatpush1.msra.mxu0 0.0
  %501 = vmatprep.subr.mxu0 0.0
  %502 = vmatpush1.msra.mxu0 0.0
  %503 = vmatprep.mubr.f32.mxu0 0.0
  %504 = vmatmul.mubr.f32.gmra.mrb[0].mxu0 %v428
  %v505 = vpop.f32.mrb[0].mxu0
  %v506 = vadd.f32 0.0, %v505
  %v507 = vpop.f32.mrb[0].mxu0
  %508 = vmatprep.mubr.f32.mxu0 0.0
  %509 = vmatmul.mubr.f32.gmra.mrb[0].mxu0 %v431
  %v510 = vpop.f32.mrb[0].mxu0
  %v511 = vadd.f32 0.0, %v510
  %v512 = vpop.f32.mrb[0].mxu0
  %513 = vmatprep.mubr.f32.mxu0 0.0
  %514 = vmatmul.mubr.f32.gmra.mrb[0].mxu0 %v434
  %v515 = vpop.f32.mrb[0].mxu0
  %v516 = vadd.f32 0.0, %v515
  %v517 = vpop.f32.mrb[0].mxu0
  %518 = vmatprep.mubr.f32.mxu0 0.0
  %519 = vmatmul.mubr.f32.gmra.mrb[0].mxu0 %v437
  %v520 = vpop.f32.mrb[0].mxu0
  %v521 = vadd.f32 0.0, %v520
  %v522 = vpop.f32.mrb[0].mxu0
  %523 = vdwg.mxu0
  %v525 = vsel %vm426, %v384, 0
  %v528 = vsel %vm426, %v385, 0
  %v531 = vsel %vm426, %v386, 0
  %v534 = vsel %vm426, %v387, 0
  %536 = vmatprep.subr.mxu0 0.0
  %537 = vmatpush1.msra.mxu0 %v409
  %538 = vmatprep.subr.mxu0 0.0
  %539 = vmatpush1.msra.mxu0 %v410
  %540 = vmatprep.subr.mxu0 0.0
  %541 = vmatpush1.msra.mxu0 %v411
  %542 = vmatprep.subr.mxu0 0.0
  %543 = vmatpush1.msra.mxu0 %v412
  %544 = vmatprep.subr.mxu0 0.0
  %545 = vmatpush1.msra.mxu0 %v413
  %546 = vmatprep.subr.mxu0 0.0
  %547 = vmatpush1.msra.mxu0 %v414
  %548 = vmatprep.subr.mxu0 0.0
  %549 = vmatpush1.msra.mxu0 %v415
  %550 = vmatprep.subr.mxu0 0.0
  %551 = vmatpush1.msra.mxu0 %v416
  %552 = vmatprep.subr.mxu0 0.0
  %553 = vmatpush1.msra.mxu0 0.0
  %554 = vmatprep.subr.mxu0 0.0
  %555 = vmatpush1.msra.mxu0 0.0
  %556 = vmatprep.subr.mxu0 0.0
  %557 = vmatpush1.msra.mxu0 0.0
  %558 = vmatprep.subr.mxu0 0.0
  %559 = vmatpush1.msra.mxu0 0.0
  %560 = vmatprep.subr.mxu0 0.0
  %561 = vmatpush1.msra.mxu0 0.0
  %562 = vmatprep.subr.mxu0 0.0
  %563 = vmatpush1.msra.mxu0 0.0
  %564 = vmatprep.subr.mxu0 0.0
  %565 = vmatpush1.msra.mxu0 0.0
  %566 = vmatprep.subr.mxu0 0.0
  %567 = vmatpush1.msra.mxu0 0.0
  %568 = vmatprep.subr.mxu0 0.0
  %569 = vmatpush1.msra.mxu0 0.0
  %570 = vmatprep.subr.mxu0 0.0
  %571 = vmatpush1.msra.mxu0 0.0
  %572 = vmatprep.subr.mxu0 0.0
  %573 = vmatpush1.msra.mxu0 0.0
  %574 = vmatprep.subr.mxu0 0.0
  %575 = vmatpush1.msra.mxu0 0.0
  %576 = vmatprep.subr.mxu0 0.0
  %577 = vmatpush1.msra.mxu0 0.0
  %578 = vmatprep.subr.mxu0 0.0
  %579 = vmatpush1.msra.mxu0 0.0
  %580 = vmatprep.subr.mxu0 0.0
  %581 = vmatpush1.msra.mxu0 0.0
  %582 = vmatprep.subr.mxu0 0.0
  %583 = vmatpush1.msra.mxu0 0.0
  %584 = vmatprep.subr.mxu0 0.0
  %585 = vmatpush1.msra.mxu0 0.0
  %586 = vmatprep.subr.mxu0 0.0
  %587 = vmatpush1.msra.mxu0 0.0
  %588 = vmatprep.subr.mxu0 0.0
  %589 = vmatpush1.msra.mxu0 0.0
  %590 = vmatprep.subr.mxu0 0.0
  %591 = vmatpush1.msra.mxu0 0.0
  %592 = vmatprep.subr.mxu0 0.0
  %593 = vmatpush1.msra.mxu0 0.0
  %594 = vmatprep.subr.mxu0 0.0
  %595 = vmatpush1.msra.mxu0 0.0
  %596 = vmatprep.subr.mxu0 0.0
  %597 = vmatpush1.msra.mxu0 0.0
  %598 = vmatprep.subr.mxu0 0.0
  %599 = vmatpush1.msra.mxu0 0.0
  %600 = vmatprep.mubr.f32.mxu0 0.0
  %601 = vmatmul.mubr.f32.gmra.mrb[0].mxu0 %v525
  %v602 = vpop.f32.mrb[0].mxu0
  %v603 = vadd.f32 %v506, %v602
  %v604 = vpop.f32.mrb[0].mxu0
  %605 = vmatprep.mubr.f32.mxu0 0.0
  %606 = vmatmul.mubr.f32.gmra.mrb[0].mxu0 %v528
  %v607 = vpop.f32.mrb[0].mxu0
  %v608 = vadd.f32 %v511, %v607
  %v609 = vpop.f32.mrb[0].mxu0
  %610 = vmatprep.mubr.f32.mxu0 0.0
  %611 = vmatmul.mubr.f32.gmra.mrb[0].mxu0 %v531
  %v612 = vpop.f32.mrb[0].mxu0
  %v613 = vadd.f32 %v516, %v612
  %v614 = vpop.f32.mrb[0].mxu0
  %615 = vmatprep.mubr.f32.mxu0 0.0
  %616 = vmatmul.mubr.f32.gmra.mrb[0].mxu0 %v534
  %v617 = vpop.f32.mrb[0].mxu0
  %v618 = vadd.f32 %v521, %v617
  %v619 = vpop.f32.mrb[0].mxu0
  %620 = vdwg.mxu0
  %s621 = scalar_lea.vmem %s1, 128
  %v622 = vld [vmem:[%s621] sm:$0xff]
  %v623 = vld [vmem:[%s621 + $0x8] sm:$0xff]
  %v624 = vld [vmem:[%s621 + $0x10] sm:$0xff]
  %v625 = vld [vmem:[%s621 + $0x18] sm:$0xff]
  %v626 = vld [vmem:[%s621 + $0x20] sm:$0xff]
  %v627 = vld [vmem:[%s621 + $0x28] sm:$0xff]
  %v628 = vld [vmem:[%s621 + $0x30] sm:$0xff]
  %v629 = vld [vmem:[%s621 + $0x38] sm:$0xff]
  %v631 = vsel %vm426, %v405, 0
  %v634 = vsel %vm426, %v406, 0
  %v637 = vsel %vm426, %v407, 0
  %v640 = vsel %vm426, %v408, 0
  %642 = vmatprep.subr.mxu0 0.0
  %643 = vmatpush1.msra.mxu0 %v622
  %644 = vmatprep.subr.mxu0 0.0
  %645 = vmatpush1.msra.mxu0 %v623
  %646 = vmatprep.subr.mxu0 0.0
  %647 = vmatpush1.msra.mxu0 %v624
  %648 = vmatprep.subr.mxu0 0.0
  %649 = vmatpush1.msra.mxu0 %v625
  %650 = vmatprep.subr.mxu0 0.0
  %651 = vmatpush1.msra.mxu0 %v626
  %652 = vmatprep.subr.mxu0 0.0
  %653 = vmatpush1.msra.mxu0 %v627
  %654 = vmatprep.subr.mxu0 0.0
  %655 = vmatpush1.msra.mxu0 %v628
  %656 = vmatprep.subr.mxu0 0.0
  %657 = vmatpush1.msra.mxu0 %v629
  %658 = vmatprep.subr.mxu0 0.0
  %659 = vmatpush1.msra.mxu0 0.0
  %660 = vmatprep.subr.mxu0 0.0
  %661 = vmatpush1.msra.mxu0 0.0
  %662 = vmatprep.subr.mxu0 0.0
  %663 = vmatpush1.msra.mxu0 0.0
  %664 = vmatprep.subr.mxu0 0.0
  %665 = vmatpush1.msra.mxu0 0.0
  %666 = vmatprep.subr.mxu0 0.0
  %667 = vmatpush1.msra.mxu0 0.0
  %668 = vmatprep.subr.mxu0 0.0
  %669 = vmatpush1.msra.mxu0 0.0
  %670 = vmatprep.subr.mxu0 0.0
  %671 = vmatpush1.msra.mxu0 0.0
  %672 = vmatprep.subr.mxu0 0.0
  %673 = vmatpush1.msra.mxu0 0.0
  %674 = vmatprep.subr.mxu0 0.0
  %675 = vmatpush1.msra.mxu0 0.0
  %676 = vmatprep.subr.mxu0 0.0
  %677 = vmatpush1.msra.mxu0 0.0
  %678 = vmatprep.subr.mxu0 0.0
  %679 = vmatpush1.msra.mxu0 0.0
  %680 = vmatprep.subr.mxu0 0.0
  %681 = vmatpush1.msra.mxu0 0.0
  %682 = vmatprep.subr.mxu0 0.0
  %683 = vmatpush1.msra.mxu0 0.0
  %684 = vmatprep.subr.mxu0 0.0
  %685 = vmatpush1.msra.mxu0 0.0
  %686 = vmatprep.subr.mxu0 0.0
  %687 = vmatpush1.msra.mxu0 0.0
  %688 = vmatprep.subr.mxu0 0.0
  %689 = vmatpush1.msra.mxu0 0.0
  %690 = vmatprep.subr.mxu0 0.0
  %691 = vmatpush1.msra.mxu0 0.0
  %692 = vmatprep.subr.mxu0 0.0
  %693 = vmatpush1.msra.mxu0 0.0
  %694 = vmatprep.subr.mxu0 0.0
  %695 = vmatpush1.msra.mxu0 0.0
  %696 = vmatprep.subr.mxu0 0.0
  %697 = vmatpush1.msra.mxu0 0.0
  %698 = vmatprep.subr.mxu0 0.0
  %699 = vmatpush1.msra.mxu0 0.0
  %700 = vmatprep.subr.mxu0 0.0
  %701 = vmatpush1.msra.mxu0 0.0
  %702 = vmatprep.subr.mxu0 0.0
  %703 = vmatpush1.msra.mxu0 0.0
  %704 = vmatprep.subr.mxu0 0.0
  %705 = vmatpush1.msra.mxu0 0.0
  %706 = vmatprep.mubr.f32.mxu0 0.0
  %707 = vmatmul.mubr.f32.gmra.mrb[0].mxu0 %v631
  %v708 = vpop.f32.mrb[0].mxu0
  %v709 = vadd.f32 0.0, %v708
  %v710 = vpop.f32.mrb[0].mxu0
  %711 = vmatprep.mubr.f32.mxu0 0.0
  %712 = vmatmul.mubr.f32.gmra.mrb[0].mxu0 %v634
  %v713 = vpop.f32.mrb[0].mxu0
  %v714 = vadd.f32 0.0, %v713
  %v715 = vpop.f32.mrb[0].mxu0
  %716 = vmatprep.mubr.f32.mxu0 0.0
  %717 = vmatmul.mubr.f32.gmra.mrb[0].mxu0 %v637
  %v718 = vpop.f32.mrb[0].mxu0
  %v719 = vadd.f32 0.0, %v718
  %v720 = vpop.f32.mrb[0].mxu0
  %721 = vmatprep.mubr.f32.mxu0 0.0
  %722 = vmatmul.mubr.f32.gmra.mrb[0].mxu0 %v640
  %v723 = vpop.f32.mrb[0].mxu0
  %v724 = vadd.f32 0.0, %v723
  %v725 = vpop.f32.mrb[0].mxu0
  %726 = vdwg.mxu0
  %v727 = vadd.f32 %v603, %v709
  %v728 = vadd.f32 %v608, %v714
  %v729 = vadd.f32 %v613, %v719
  %v730 = vadd.f32 %v618, %v724
  %v732 = vlaneseq
  %v733 = vshrl.u32 %v732, 7
  %v734 = vsub.s32 0, %v733
  %v735 = vrot.slane %v366, %v734
  %v737 = vadd.f32 %v727, %v735
  %v738 = vadd.f32 %v728, %v735
  %v739 = vadd.f32 %v729, %v735
  %v740 = vadd.f32 %v730, %v735
  %v741 = vmax.f32 %v737, 0.0
  %v742 = vmax.f32 %v738, 0.0
  %v743 = vmax.f32 %v739, 0.0
  %v744 = vmax.f32 %v740, 0.0
  %v745 = vld [vmem:[%s3] sm:$0x1]
  %v746 = vld [vmem:[%s4] sm:$0x1]
  %v747 = vadd.f32 %v741, %v742
  %v748 = vadd.f32 %v747, %v743
  %v749 = vadd.f32 %v748, %v744
  %v750 = vrot.slane %v749, 4
  %v751 = vadd.f32 %v749, %v750
  %v752 = vrot.slane %v751, 2
  %v753 = vadd.f32 %v751, %v752
  %v754 = vrot.slane %v753, 1
  %v755 = vadd.f32 %v753, %v754
  %v756 = vmul.f32 %v741, %v741
  %v757 = vmul.f32 %v742, %v742
  %v758 = vmul.f32 %v743, %v743
  %v759 = vmul.f32 %v744, %v744
  %v760 = vadd.f32 %v756, %v757
  %v761 = vadd.f32 %v760, %v758
  %v762 = vadd.f32 %v761, %v759
  %v763 = vrot.slane %v762, 4
  %v764 = vadd.f32 %v762, %v763
  %v765 = vrot.slane %v764, 2
  %v766 = vadd.f32 %v764, %v765
  %v767 = vrot.slane %v766, 1
  %v768 = vadd.f32 %v766, %v767
  %vm769 = vcmask 1040384
  %v770 = vsel %vm769, %v755, %v768
  %771 = vmatprep.subr.mxu0 0.0
  %772 = vmatpush1.msra.mxu0 %v331
  %773 = vmatprep.subr.mxu0 0.0
  %774 = vmatpush1.msra.mxu0 %v332
  %775 = vmatprep.subr.mxu0 0.0
  %776 = vmatpush1.msra.mxu0 %v333
  %777 = vmatprep.subr.mxu0 0.0
  %778 = vmatpush1.msra.mxu0 %v334
  %779 = vmatprep.subr.mxu0 0.0
  %780 = vmatpush1.msra.mxu0 %v335
  %781 = vmatprep.subr.mxu0 0.0
  %782 = vmatpush1.msra.mxu0 %v336
  %783 = vmatprep.subr.mxu0 0.0
  %784 = vmatpush1.msra.mxu0 %v337
  %785 = vmatprep.subr.mxu0 0.0
  %786 = vmatpush1.msra.mxu0 %v338
  %787 = vmatprep.subr.mxu0 0.0
  %788 = vmatpush1.msra.mxu0 %v339
  %789 = vmatprep.subr.mxu0 0.0
  %790 = vmatpush1.msra.mxu0 %v340
  %791 = vmatprep.subr.mxu0 0.0
  %792 = vmatpush1.msra.mxu0 %v341
  %793 = vmatprep.subr.mxu0 0.0
  %794 = vmatpush1.msra.mxu0 %v342
  %795 = vmatprep.subr.mxu0 0.0
  %796 = vmatpush1.msra.mxu0 %v343
  %797 = vmatprep.subr.mxu0 0.0
  %798 = vmatpush1.msra.mxu0 %v344
  %799 = vmatprep.subr.mxu0 0.0
  %800 = vmatpush1.msra.mxu0 %v345
  %801 = vmatprep.subr.mxu0 0.0
  %802 = vmatpush1.msra.mxu0 %v346
  %803 = vmatprep.subr.mxu0 0.0
  %804 = vmatpush1.msra.mxu0 0.0
  %805 = vmatprep.subr.mxu0 0.0
  %806 = vmatpush1.msra.mxu0 0.0
  %807 = vmatprep.subr.mxu0 0.0
  %808 = vmatpush1.msra.mxu0 0.0
  %809 = vmatprep.subr.mxu0 0.0
  %810 = vmatpush1.msra.mxu0 0.0
  %811 = vmatprep.subr.mxu0 0.0
  %812 = vmatpush1.msra.mxu0 0.0
  %813 = vmatprep.subr.mxu0 0.0
  %814 = vmatpush1.msra.mxu0 0.0
  %815 = vmatprep.subr.mxu0 0.0
  %816 = vmatpush1.msra.mxu0 0.0
  %817 = vmatprep.subr.mxu0 0.0
  %818 = vmatpush1.msra.mxu0 0.0
  %819 = vmatprep.subr.mxu0 0.0
  %820 = vmatpush1.msra.mxu0 0.0
  %821 = vmatprep.subr.mxu0 0.0
  %822 = vmatpush1.msra.mxu0 0.0
  %823 = vmatprep.subr.mxu0 0.0
  %824 = vmatpush1.msra.mxu0 0.0
  %825 = vmatprep.subr.mxu0 0.0
  %826 = vmatpush1.msra.mxu0 0.0
  %827 = vmatprep.subr.mxu0 0.0
  %828 = vmatpush1.msra.mxu0 0.0
  %829 = vmatprep.subr.mxu0 0.0
  %830 = vmatpush1.msra.mxu0 0.0
  %831 = vmatprep.subr.mxu0 0.0
  %832 = vmatpush1.msra.mxu0 0.0
  %833 = vmatprep.subr.mxu0 0.0
  %834 = vmatpush1.msra.mxu0 0.0
  %835 = vmatprep.mubr.f32.mxu0 0.0
  %836 = vmatmul.mubr.f32.gmra.mrb[0].mxu0 %v770
  %v837 = vpop.f32.mrb[0].mxu0
  %v838 = vadd.f32 0.0, %v837
  %v839 = vpop.f32.mrb[0].mxu0
  %840 = vdwg.mxu0
  %v841 = vmul.f32 %v838, 0.001953125
  %v842 = vmul.f32 %v841, %v841
  %v844 = vrot.slane %v842, 7
  %v846 = vsub.f32 %v841, %v844
  %v847 = vadd.f32 %v846, 1e-05
  %v848 = vrsqrt.pop %v847
  %v849 = vsel %vm769, %v841, %v848
  %vm850 = vcmask 64512
  %v852 = vsel %vm850, %v849, 0
  %854 = vmatprep.subr.mxu0 0.0
  %855 = vmatpush1.msra.mxu0 %v361
  %856 = vmatprep.subr.mxu0 0.0
  %857 = vmatpush1.msra.mxu0 0.0
  %858 = vmatprep.subr.mxu0 0.0
  %859 = vmatpush1.msra.mxu0 0.0
  %860 = vmatprep.subr.mxu0 0.0
  %861 = vmatpush1.msra.mxu0 0.0
  %862 = vmatprep.subr.mxu0 0.0
  %863 = vmatpush1.msra.mxu0 0.0
  %864 = vmatprep.subr.mxu0 0.0
  %865 = vmatpush1.msra.mxu0 0.0
  %866 = vmatprep.subr.mxu0 0.0
  %867 = vmatpush1.msra.mxu0 0.0
  %868 = vmatprep.subr.mxu0 0.0
  %869 = vmatpush1.msra.mxu0 0.0
  %870 = vmatprep.subr.mxu0 0.0
  %871 = vmatpush1.msra.mxu0 0.0
  %872 = vmatprep.subr.mxu0 0.0
  %873 = vmatpush1.msra.mxu0 0.0
  %874 = vmatprep.subr.mxu0 0.0
  %875 = vmatpush1.msra.mxu0 0.0
  %876 = vmatprep.subr.mxu0 0.0
  %877 = vmatpush1.msra.mxu0 0.0
  %878 = vmatprep.subr.mxu0 0.0
  %879 = vmatpush1.msra.mxu0 0.0
  %880 = vmatprep.subr.mxu0 0.0
  %881 = vmatpush1.msra.mxu0 0.0
  %882 = vmatprep.subr.mxu0 0.0
  %883 = vmatpush1.msra.mxu0 0.0
  %884 = vmatprep.subr.mxu0 0.0
  %885 = vmatpush1.msra.mxu0 0.0
  %886 = vmatprep.subr.mxu0 0.0
  %887 = vmatpush1.msra.mxu0 0.0
  %888 = vmatprep.subr.mxu0 0.0
  %889 = vmatpush1.msra.mxu0 0.0
  %890 = vmatprep.subr.mxu0 0.0
  %891 = vmatpush1.msra.mxu0 0.0
  %892 = vmatprep.subr.mxu0 0.0
  %893 = vmatpush1.msra.mxu0 0.0
  %894 = vmatprep.subr.mxu0 0.0
  %895 = vmatpush1.msra.mxu0 0.0
  %896 = vmatprep.subr.mxu0 0.0
  %897 = vmatpush1.msra.mxu0 0.0
  %898 = vmatprep.subr.mxu0 0.0
  %899 = vmatpush1.msra.mxu0 0.0
  %900 = vmatprep.subr.mxu0 0.0
  %901 = vmatpush1.msra.mxu0 0.0
  %902 = vmatprep.subr.mxu0 0.0
  %903 = vmatpush1.msra.mxu0 0.0
  %904 = vmatprep.subr.mxu0 0.0
  %905 = vmatpush1.msra.mxu0 0.0
  %906 = vmatprep.subr.mxu0 0.0
  %907 = vmatpush1.msra.mxu0 0.0
  %908 = vmatprep.subr.mxu0 0.0
  %909 = vmatpush1.msra.mxu0 0.0
  %910 = vmatprep.subr.mxu0 0.0
  %911 = vmatpush1.msra.mxu0 0.0
  %912 = vmatprep.subr.mxu0 0.0
  %913 = vmatpush1.msra.mxu0 0.0
  %914 = vmatprep.subr.mxu0 0.0
  %915 = vmatpush1.msra.mxu0 0.0
  %916 = vmatprep.subr.mxu0 0.0
  %917 = vmatpush1.msra.mxu0 0.0
  %918 = vmatprep.mubr.f32.mxu0 0.0
  %919 = vmatmul.mubr.f32.gmra.mrb[0].mxu0 %v852
  %v920 = vpop.f32.mrb[0].mxu0
  %v921 = vadd.f32 0.0, %v920
  %v922 = vpop.f32.mrb[0].mxu0
  %923 = vdwg.mxu0
  %v925 = vlaneseq
  %v926 = vshrl.u32 %v925, 7
  %v927 = vsub.s32 0, %v926
  %v928 = vrot.slane %v745, %v927
  %v930 = vmul.f32 %v921, %v928
  %v932 = vrot.slane %v930, 1
  %v934 = vmul.f32 %v921, %v932
  %v935 = vsub.f32 %v746, %v934
  %v936 = vlaneseq
  %v937 = vshrl.u32 %v936, 7
  %v938 = vsub.s32 1, %v937
  %v939 = vrot.slane %v930, %v938
  %v940 = vmul.f32 %v741, %v939
  %v941 = vmul.f32 %v742, %v939
  %v942 = vmul.f32 %v743, %v939
  %v943 = vmul.f32 %v744, %v939
  %v945 = vlaneseq
  %v946 = vshrl.u32 %v945, 7
  %v947 = vsub.s32 0, %v946
  %v948 = vrot.slane %v935, %v947
  %v950 = vadd.f32 %v940, %v948
  %v951 = vadd.f32 %v941, %v948
  %v952 = vadd.f32 %v942, %v948
  %v953 = vadd.f32 %v943, %v948
  %v954 = vld [vmem:[%s6] sm:$0x1]
  %v955 = vrot.slane %v950, 7
  %v956 = vrot.slane %v951, 7
  %v957 = vrot.slane %v952, 7
  %v958 = vrot.slane %v953, 7
  %v959 = vsel %vm371, %v957, %v958
  %v960 = vsel %vm371, %v956, %v957
  %v961 = vsel %vm371, %v955, %v956
  %v962 = vsel %vm371, %v958, %v955
  %v963 = vsel %vm380, %v962, 0.0
  %v964 = vsel %vm381, %v961, 0.0
  %v965 = vsel %vm382, %v960, 0.0
  %v966 = vsel %vm383, %v959, 0.0
  %v967 = vrot.slane %v950, 1
  %v968 = vrot.slane %v951, 1
  %v969 = vrot.slane %v952, 1
  %v970 = vrot.slane %v953, 1
  %v971 = vsel %vm392, %v969, %v970
  %v972 = vsel %vm392, %v968, %v969
  %v973 = vsel %vm392, %v967, %v968
  %v974 = vsel %vm392, %v970, %v967
  %v975 = vsel %vm401, %v973, 0.0
  %v976 = vsel %vm402, %v972, 0.0
  %v977 = vsel %vm403, %v971, 0.0
  %v978 = vsel %vm404, %v974, 0.0
  %v979 = vld [vmem:[%s5] sm:$0xff]
  %v980 = vld [vmem:[%s5 + $0x8] sm:$0xff]
  %v981 = vld [vmem:[%s5 + $0x10] sm:$0xff]
  %v982 = vld [vmem:[%s5 + $0x18] sm:$0xff]
  %v983 = vld [vmem:[%s5 + $0x20] sm:$0xff]
  %v984 = vld [vmem:[%s5 + $0x28] sm:$0xff]
  %v985 = vld [vmem:[%s5 + $0x30] sm:$0xff]
  %v986 = vld [vmem:[%s5 + $0x38] sm:$0xff]
  %v987 = vld [vmem:[%s5 + $0x40] sm:$0xff]
  %v988 = vld [vmem:[%s5 + $0x48] sm:$0xff]
  %v989 = vld [vmem:[%s5 + $0x50] sm:$0xff]
  %v990 = vld [vmem:[%s5 + $0x58] sm:$0xff]
  %v991 = vld [vmem:[%s5 + $0x60] sm:$0xff]
  %v992 = vld [vmem:[%s5 + $0x68] sm:$0xff]
  %v993 = vld [vmem:[%s5 + $0x70] sm:$0xff]
  %v994 = vld [vmem:[%s5 + $0x78] sm:$0xff]
  %s995 = scalar_lea.vmem %s5, 128
  %v996 = vld [vmem:[%s995] sm:$0xff]
  %v997 = vld [vmem:[%s995 + $0x8] sm:$0xff]
  %v998 = vld [vmem:[%s995 + $0x10] sm:$0xff]
  %v999 = vld [vmem:[%s995 + $0x18] sm:$0xff]
  %v1000 = vld [vmem:[%s995 + $0x20] sm:$0xff]
  %v1001 = vld [vmem:[%s995 + $0x28] sm:$0xff]
  %v1002 = vld [vmem:[%s995 + $0x30] sm:$0xff]
  %v1003 = vld [vmem:[%s995 + $0x38] sm:$0xff]
  %v1004 = vld [vmem:[%s995 + $0x40] sm:$0xff]
  %v1005 = vld [vmem:[%s995 + $0x48] sm:$0xff]
  %v1006 = vld [vmem:[%s995 + $0x50] sm:$0xff]
  %v1007 = vld [vmem:[%s995 + $0x58] sm:$0xff]
  %v1008 = vld [vmem:[%s995 + $0x60] sm:$0xff]
  %v1009 = vld [vmem:[%s995 + $0x68] sm:$0xff]
  %v1010 = vld [vmem:[%s995 + $0x70] sm:$0xff]
  %v1011 = vld [vmem:[%s995 + $0x78] sm:$0xff]
  %1012 = vmatprep.subr.mxu0 0.0
  %1013 = vmatpush1.msra.mxu0 %v996
  %1014 = vmatprep.subr.mxu0 0.0
  %1015 = vmatpush1.msra.mxu0 %v997
  %1016 = vmatprep.subr.mxu0 0.0
  %1017 = vmatpush1.msra.mxu0 %v998
  %1018 = vmatprep.subr.mxu0 0.0
  %1019 = vmatpush1.msra.mxu0 %v999
  %1020 = vmatprep.subr.mxu0 0.0
  %1021 = vmatpush1.msra.mxu0 %v1000
  %1022 = vmatprep.subr.mxu0 0.0
  %1023 = vmatpush1.msra.mxu0 %v1001
  %1024 = vmatprep.subr.mxu0 0.0
  %1025 = vmatpush1.msra.mxu0 %v1002
  %1026 = vmatprep.subr.mxu0 0.0
  %1027 = vmatpush1.msra.mxu0 %v1003
  %1028 = vmatprep.subr.mxu0 0.0
  %1029 = vmatpush1.msra.mxu0 %v1004
  %1030 = vmatprep.subr.mxu0 0.0
  %1031 = vmatpush1.msra.mxu0 %v1005
  %1032 = vmatprep.subr.mxu0 0.0
  %1033 = vmatpush1.msra.mxu0 %v1006
  %1034 = vmatprep.subr.mxu0 0.0
  %1035 = vmatpush1.msra.mxu0 %v1007
  %1036 = vmatprep.subr.mxu0 0.0
  %1037 = vmatpush1.msra.mxu0 %v1008
  %1038 = vmatprep.subr.mxu0 0.0
  %1039 = vmatpush1.msra.mxu0 %v1009
  %1040 = vmatprep.subr.mxu0 0.0
  %1041 = vmatpush1.msra.mxu0 %v1010
  %1042 = vmatprep.subr.mxu0 0.0
  %1043 = vmatpush1.msra.mxu0 %v1011
  %1044 = vmatprep.subr.mxu0 0.0
  %1045 = vmatpush1.msra.mxu0 0.0
  %1046 = vmatprep.subr.mxu0 0.0
  %1047 = vmatpush1.msra.mxu0 0.0
  %1048 = vmatprep.subr.mxu0 0.0
  %1049 = vmatpush1.msra.mxu0 0.0
  %1050 = vmatprep.subr.mxu0 0.0
  %1051 = vmatpush1.msra.mxu0 0.0
  %1052 = vmatprep.subr.mxu0 0.0
  %1053 = vmatpush1.msra.mxu0 0.0
  %1054 = vmatprep.subr.mxu0 0.0
  %1055 = vmatpush1.msra.mxu0 0.0
  %1056 = vmatprep.subr.mxu0 0.0
  %1057 = vmatpush1.msra.mxu0 0.0
  %1058 = vmatprep.subr.mxu0 0.0
  %1059 = vmatpush1.msra.mxu0 0.0
  %1060 = vmatprep.subr.mxu0 0.0
  %1061 = vmatpush1.msra.mxu0 0.0
  %1062 = vmatprep.subr.mxu0 0.0
  %1063 = vmatpush1.msra.mxu0 0.0
  %1064 = vmatprep.subr.mxu0 0.0
  %1065 = vmatpush1.msra.mxu0 0.0
  %1066 = vmatprep.subr.mxu0 0.0
  %1067 = vmatpush1.msra.mxu0 0.0
  %1068 = vmatprep.subr.mxu0 0.0
  %1069 = vmatpush1.msra.mxu0 0.0
  %1070 = vmatprep.subr.mxu0 0.0
  %1071 = vmatpush1.msra.mxu0 0.0
  %1072 = vmatprep.subr.mxu0 0.0
  %1073 = vmatpush1.msra.mxu0 0.0
  %1074 = vmatprep.subr.mxu0 0.0
  %1075 = vmatpush1.msra.mxu0 0.0
  %1076 = vmatprep.mubr.f32.mxu0 0.0
  %1077 = vmatmul.mubr.f32.gmra.mrb[0].mxu0 %v950
  %v1078 = vpop.f32.mrb[0].mxu0
  %v1079 = vadd.f32 0.0, %v1078
  %v1080 = vpop.f32.mrb[0].mxu0
  %1081 = vmatprep.mubr.f32.mxu0 0.0
  %1082 = vmatmul.mubr.f32.gmra.mrb[0].mxu0 %v951
  %v1083 = vpop.f32.mrb[0].mxu0
  %v1084 = vadd.f32 0.0, %v1083
  %v1085 = vpop.f32.mrb[0].mxu0
  %1086 = vmatprep.mubr.f32.mxu0 0.0
  %1087 = vmatmul.mubr.f32.gmra.mrb[0].mxu0 %v952
  %v1088 = vpop.f32.mrb[0].mxu0
  %v1089 = vadd.f32 0.0, %v1088
  %v1090 = vpop.f32.mrb[0].mxu0
  %1091 = vmatprep.mubr.f32.mxu0 0.0
  %1092 = vmatmul.mubr.f32.gmra.mrb[0].mxu0 %v953
  %v1093 = vpop.f32.mrb[0].mxu0
  %v1094 = vadd.f32 0.0, %v1093
  %v1095 = vpop.f32.mrb[0].mxu0
  %1096 = vdwg.mxu0
  %1097 = vmatprep.subr.mxu0 0.0
  %1098 = vmatpush1.msra.mxu0 %v979
  %1099 = vmatprep.subr.mxu0 0.0
  %1100 = vmatpush1.msra.mxu0 %v980
  %1101 = vmatprep.subr.mxu0 0.0
  %1102 = vmatpush1.msra.mxu0 %v981
  %1103 = vmatprep.subr.mxu0 0.0
  %1104 = vmatpush1.msra.mxu0 %v982
  %1105 = vmatprep.subr.mxu0 0.0
  %1106 = vmatpush1.msra.mxu0 %v983
  %1107 = vmatprep.subr.mxu0 0.0
  %1108 = vmatpush1.msra.mxu0 %v984
  %1109 = vmatprep.subr.mxu0 0.0
  %1110 = vmatpush1.msra.mxu0 %v985
  %1111 = vmatprep.subr.mxu0 0.0
  %1112 = vmatpush1.msra.mxu0 %v986
  %1113 = vmatprep.subr.mxu0 0.0
  %1114 = vmatpush1.msra.mxu0 %v987
  %1115 = vmatprep.subr.mxu0 0.0
  %1116 = vmatpush1.msra.mxu0 %v988
  %1117 = vmatprep.subr.mxu0 0.0
  %1118 = vmatpush1.msra.mxu0 %v989
  %1119 = vmatprep.subr.mxu0 0.0
  %1120 = vmatpush1.msra.mxu0 %v990
  %1121 = vmatprep.subr.mxu0 0.0
  %1122 = vmatpush1.msra.mxu0 %v991
  %1123 = vmatprep.subr.mxu0 0.0
  %1124 = vmatpush1.msra.mxu0 %v992
  %1125 = vmatprep.subr.mxu0 0.0
  %1126 = vmatpush1.msra.mxu0 %v993
  %1127 = vmatprep.subr.mxu0 0.0
  %1128 = vmatpush1.msra.mxu0 %v994
  %1129 = vmatprep.subr.mxu0 0.0
  %1130 = vmatpush1.msra.mxu0 0.0
  %1131 = vmatprep.subr.mxu0 0.0
  %1132 = vmatpush1.msra.mxu0 0.0
  %1133 = vmatprep.subr.mxu0 0.0
  %1134 = vmatpush1.msra.mxu0 0.0
  %1135 = vmatprep.subr.mxu0 0.0
  %1136 = vmatpush1.msra.mxu0 0.0
  %1137 = vmatprep.subr.mxu0 0.0
  %1138 = vmatpush1.msra.mxu0 0.0
  %1139 = vmatprep.subr.mxu0 0.0
  %1140 = vmatpush1.msra.mxu0 0.0
  %1141 = vmatprep.subr.mxu0 0.0
  %1142 = vmatpush1.msra.mxu0 0.0
  %1143 = vmatprep.subr.mxu0 0.0
  %1144 = vmatpush1.msra.mxu0 0.0
  %1145 = vmatprep.subr.mxu0 0.0
  %1146 = vmatpush1.msra.mxu0 0.0
  %1147 = vmatprep.subr.mxu0 0.0
  %1148 = vmatpush1.msra.mxu0 0.0
  %1149 = vmatprep.subr.mxu0 0.0
  %1150 = vmatpush1.msra.mxu0 0.0
  %1151 = vmatprep.subr.mxu0 0.0
  %1152 = vmatpush1.msra.mxu0 0.0
  %1153 = vmatprep.subr.mxu0 0.0
  %1154 = vmatpush1.msra.mxu0 0.0
  %1155 = vmatprep.subr.mxu0 0.0
  %1156 = vmatpush1.msra.mxu0 0.0
  %1157 = vmatprep.subr.mxu0 0.0
  %1158 = vmatpush1.msra.mxu0 0.0
  %1159 = vmatprep.subr.mxu0 0.0
  %1160 = vmatpush1.msra.mxu0 0.0
  %1161 = vmatprep.mubr.f32.mxu0 0.0
  %1162 = vmatmul.mubr.f32.gmra.mrb[0].mxu0 %v963
  %v1163 = vpop.f32.mrb[0].mxu0
  %v1164 = vadd.f32 %v1079, %v1163
  %v1165 = vpop.f32.mrb[0].mxu0
  %1166 = vmatprep.mubr.f32.mxu0 0.0
  %1167 = vmatmul.mubr.f32.gmra.mrb[0].mxu0 %v964
  %v1168 = vpop.f32.mrb[0].mxu0
  %v1169 = vadd.f32 %v1084, %v1168
  %v1170 = vpop.f32.mrb[0].mxu0
  %1171 = vmatprep.mubr.f32.mxu0 0.0
  %1172 = vmatmul.mubr.f32.gmra.mrb[0].mxu0 %v965
  %v1173 = vpop.f32.mrb[0].mxu0
  %v1174 = vadd.f32 %v1089, %v1173
  %v1175 = vpop.f32.mrb[0].mxu0
  %1176 = vmatprep.mubr.f32.mxu0 0.0
  %1177 = vmatmul.mubr.f32.gmra.mrb[0].mxu0 %v966
  %v1178 = vpop.f32.mrb[0].mxu0
  %v1179 = vadd.f32 %v1094, %v1178
  %v1180 = vpop.f32.mrb[0].mxu0
  %1181 = vdwg.mxu0
  %s1182 = scalar_lea.vmem %s5, 256
  %v1183 = vld [vmem:[%s1182] sm:$0xff]
  %v1184 = vld [vmem:[%s1182 + $0x8] sm:$0xff]
  %v1185 = vld [vmem:[%s1182 + $0x10] sm:$0xff]
  %v1186 = vld [vmem:[%s1182 + $0x18] sm:$0xff]
  %v1187 = vld [vmem:[%s1182 + $0x20] sm:$0xff]
  %v1188 = vld [vmem:[%s1182 + $0x28] sm:$0xff]
  %v1189 = vld [vmem:[%s1182 + $0x30] sm:$0xff]
  %v1190 = vld [vmem:[%s1182 + $0x38] sm:$0xff]
  %v1191 = vld [vmem:[%s1182 + $0x40] sm:$0xff]
  %v1192 = vld [vmem:[%s1182 + $0x48] sm:$0xff]
  %v1193 = vld [vmem:[%s1182 + $0x50] sm:$0xff]
  %v1194 = vld [vmem:[%s1182 + $0x58] sm:$0xff]
  %v1195 = vld [vmem:[%s1182 + $0x60] sm:$0xff]
  %v1196 = vld [vmem:[%s1182 + $0x68] sm:$0xff]
  %v1197 = vld [vmem:[%s1182 + $0x70] sm:$0xff]
  %v1198 = vld [vmem:[%s1182 + $0x78] sm:$0xff]
  %1199 = vmatprep.subr.mxu0 0.0
  %1200 = vmatpush1.msra.mxu0 %v1183
  %1201 = vmatprep.subr.mxu0 0.0
  %1202 = vmatpush1.msra.mxu0 %v1184
  %1203 = vmatprep.subr.mxu0 0.0
  %1204 = vmatpush1.msra.mxu0 %v1185
  %1205 = vmatprep.subr.mxu0 0.0
  %1206 = vmatpush1.msra.mxu0 %v1186
  %1207 = vmatprep.subr.mxu0 0.0
  %1208 = vmatpush1.msra.mxu0 %v1187
  %1209 = vmatprep.subr.mxu0 0.0
  %1210 = vmatpush1.msra.mxu0 %v1188
  %1211 = vmatprep.subr.mxu0 0.0
  %1212 = vmatpush1.msra.mxu0 %v1189
  %1213 = vmatprep.subr.mxu0 0.0
  %1214 = vmatpush1.msra.mxu0 %v1190
  %1215 = vmatprep.subr.mxu0 0.0
  %1216 = vmatpush1.msra.mxu0 %v1191
  %1217 = vmatprep.subr.mxu0 0.0
  %1218 = vmatpush1.msra.mxu0 %v1192
  %1219 = vmatprep.subr.mxu0 0.0
  %1220 = vmatpush1.msra.mxu0 %v1193
  %1221 = vmatprep.subr.mxu0 0.0
  %1222 = vmatpush1.msra.mxu0 %v1194
  %1223 = vmatprep.subr.mxu0 0.0
  %1224 = vmatpush1.msra.mxu0 %v1195
  %1225 = vmatprep.subr.mxu0 0.0
  %1226 = vmatpush1.msra.mxu0 %v1196
  %1227 = vmatprep.subr.mxu0 0.0
  %1228 = vmatpush1.msra.mxu0 %v1197
  %1229 = vmatprep.subr.mxu0 0.0
  %1230 = vmatpush1.msra.mxu0 %v1198
  %1231 = vmatprep.subr.mxu0 0.0
  %1232 = vmatpush1.msra.mxu0 0.0
  %1233 = vmatprep.subr.mxu0 0.0
  %1234 = vmatpush1.msra.mxu0 0.0
  %1235 = vmatprep.subr.mxu0 0.0
  %1236 = vmatpush1.msra.mxu0 0.0
  %1237 = vmatprep.subr.mxu0 0.0
  %1238 = vmatpush1.msra.mxu0 0.0
  %1239 = vmatprep.subr.mxu0 0.0
  %1240 = vmatpush1.msra.mxu0 0.0
  %1241 = vmatprep.subr.mxu0 0.0
  %1242 = vmatpush1.msra.mxu0 0.0
  %1243 = vmatprep.subr.mxu0 0.0
  %1244 = vmatpush1.msra.mxu0 0.0
  %1245 = vmatprep.subr.mxu0 0.0
  %1246 = vmatpush1.msra.mxu0 0.0
  %1247 = vmatprep.subr.mxu0 0.0
  %1248 = vmatpush1.msra.mxu0 0.0
  %1249 = vmatprep.subr.mxu0 0.0
  %1250 = vmatpush1.msra.mxu0 0.0
  %1251 = vmatprep.subr.mxu0 0.0
  %1252 = vmatpush1.msra.mxu0 0.0
  %1253 = vmatprep.subr.mxu0 0.0
  %1254 = vmatpush1.msra.mxu0 0.0
  %1255 = vmatprep.subr.mxu0 0.0
  %1256 = vmatpush1.msra.mxu0 0.0
  %1257 = vmatprep.subr.mxu0 0.0
  %1258 = vmatpush1.msra.mxu0 0.0
  %1259 = vmatprep.subr.mxu0 0.0
  %1260 = vmatpush1.msra.mxu0 0.0
  %1261 = vmatprep.subr.mxu0 0.0
  %1262 = vmatpush1.msra.mxu0 0.0
  %1263 = vmatprep.mubr.f32.mxu0 0.0
  %1264 = vmatmul.mubr.f32.gmra.mrb[0].mxu0 %v975
  %v1265 = vpop.f32.mrb[0].mxu0
  %v1266 = vadd.f32 0.0, %v1265
  %v1267 = vpop.f32.mrb[0].mxu0
  %1268 = vmatprep.mubr.f32.mxu0 0.0
  %1269 = vmatmul.mubr.f32.gmra.mrb[0].mxu0 %v976
  %v1270 = vpop.f32.mrb[0].mxu0
  %v1271 = vadd.f32 0.0, %v1270
  %v1272 = vpop.f32.mrb[0].mxu0
  %1273 = vmatprep.mubr.f32.mxu0 0.0
  %1274 = vmatmul.mubr.f32.gmra.mrb[0].mxu0 %v977
  %v1275 = vpop.f32.mrb[0].mxu0
  %v1276 = vadd.f32 0.0, %v1275
  %v1277 = vpop.f32.mrb[0].mxu0
  %1278 = vmatprep.mubr.f32.mxu0 0.0
  %1279 = vmatmul.mubr.f32.gmra.mrb[0].mxu0 %v978
  %v1280 = vpop.f32.mrb[0].mxu0
  %v1281 = vadd.f32 0.0, %v1280
  %v1282 = vpop.f32.mrb[0].mxu0
  %1283 = vdwg.mxu0
  %v1284 = vadd.f32 %v1164, %v1266
  %v1285 = vadd.f32 %v1169, %v1271
  %v1286 = vadd.f32 %v1174, %v1276
  %v1287 = vadd.f32 %v1179, %v1281
  %v1289 = vlaneseq
  %v1290 = vshrl.u32 %v1289, 7
  %v1291 = vsub.s32 0, %v1290
  %v1292 = vrot.slane %v954, %v1291
  %v1294 = vadd.f32 %v1284, %v1292
  %v1295 = vadd.f32 %v1285, %v1292
  %v1296 = vadd.f32 %v1286, %v1292
  %v1297 = vadd.f32 %v1287, %v1292
  %v1298 = vmax.f32 %v1294, 0.0
  %v1299 = vmax.f32 %v1295, 0.0
  %v1300 = vmax.f32 %v1296, 0.0
  %v1301 = vmax.f32 %v1297, 0.0
  %v1302 = vld [vmem:[%s7] sm:$0x1]
  %v1303 = vld [vmem:[%s8] sm:$0x1]
  %v1304 = vadd.f32 %v1298, %v1299
  %v1305 = vadd.f32 %v1304, %v1300
  %v1306 = vadd.f32 %v1305, %v1301
  %v1307 = vrot.slane %v1306, 4
  %v1308 = vadd.f32 %v1306, %v1307
  %v1309 = vrot.slane %v1308, 2
  %v1310 = vadd.f32 %v1308, %v1309
  %v1311 = vrot.slane %v1310, 1
  %v1312 = vadd.f32 %v1310, %v1311
  %v1313 = vmul.f32 %v1298, %v1298
  %v1314 = vmul.f32 %v1299, %v1299
  %v1315 = vmul.f32 %v1300, %v1300
  %v1316 = vmul.f32 %v1301, %v1301
  %v1317 = vadd.f32 %v1313, %v1314
  %v1318 = vadd.f32 %v1317, %v1315
  %v1319 = vadd.f32 %v1318, %v1316
  %v1320 = vrot.slane %v1319, 4
  %v1321 = vadd.f32 %v1319, %v1320
  %v1322 = vrot.slane %v1321, 2
  %v1323 = vadd.f32 %v1321, %v1322
  %v1324 = vrot.slane %v1323, 1
  %v1325 = vadd.f32 %v1323, %v1324
  %v1326 = vsel %vm769, %v1312, %v1325
  %1327 = vmatprep.subr.mxu0 0.0
  %1328 = vmatpush1.msra.mxu0 %v331
  %1329 = vmatprep.subr.mxu0 0.0
  %1330 = vmatpush1.msra.mxu0 %v332
  %1331 = vmatprep.subr.mxu0 0.0
  %1332 = vmatpush1.msra.mxu0 %v333
  %1333 = vmatprep.subr.mxu0 0.0
  %1334 = vmatpush1.msra.mxu0 %v334
  %1335 = vmatprep.subr.mxu0 0.0
  %1336 = vmatpush1.msra.mxu0 %v335
  %1337 = vmatprep.subr.mxu0 0.0
  %1338 = vmatpush1.msra.mxu0 %v336
  %1339 = vmatprep.subr.mxu0 0.0
  %1340 = vmatpush1.msra.mxu0 %v337
  %1341 = vmatprep.subr.mxu0 0.0
  %1342 = vmatpush1.msra.mxu0 %v338
  %1343 = vmatprep.subr.mxu0 0.0
  %1344 = vmatpush1.msra.mxu0 %v339
  %1345 = vmatprep.subr.mxu0 0.0
  %1346 = vmatpush1.msra.mxu0 %v340
  %1347 = vmatprep.subr.mxu0 0.0
  %1348 = vmatpush1.msra.mxu0 %v341
  %1349 = vmatprep.subr.mxu0 0.0
  %1350 = vmatpush1.msra.mxu0 %v342
  %1351 = vmatprep.subr.mxu0 0.0
  %1352 = vmatpush1.msra.mxu0 %v343
  %1353 = vmatprep.subr.mxu0 0.0
  %1354 = vmatpush1.msra.mxu0 %v344
  %1355 = vmatprep.subr.mxu0 0.0
  %1356 = vmatpush1.msra.mxu0 %v345
  %1357 = vmatprep.subr.mxu0 0.0
  %1358 = vmatpush1.msra.mxu0 %v346
  %1359 = vmatprep.subr.mxu0 0.0
  %1360 = vmatpush1.msra.mxu0 0.0
  %1361 = vmatprep.subr.mxu0 0.0
  %1362 = vmatpush1.msra.mxu0 0.0
  %1363 = vmatprep.subr.mxu0 0.0
  %1364 = vmatpush1.msra.mxu0 0.0
  %1365 = vmatprep.subr.mxu0 0.0
  %1366 = vmatpush1.msra.mxu0 0.0
  %1367 = vmatprep.subr.mxu0 0.0
  %1368 = vmatpush1.msra.mxu0 0.0
  %1369 = vmatprep.subr.mxu0 0.0
  %1370 = vmatpush1.msra.mxu0 0.0
  %1371 = vmatprep.subr.mxu0 0.0
  %1372 = vmatpush1.msra.mxu0 0.0
  %1373 = vmatprep.subr.mxu0 0.0
  %1374 = vmatpush1.msra.mxu0 0.0
  %1375 = vmatprep.subr.mxu0 0.0
  %1376 = vmatpush1.msra.mxu0 0.0
  %1377 = vmatprep.subr.mxu0 0.0
  %1378 = vmatpush1.msra.mxu0 0.0
  %1379 = vmatprep.subr.mxu0 0.0
  %1380 = vmatpush1.msra.mxu0 0.0
  %1381 = vmatprep.subr.mxu0 0.0
  %1382 = vmatpush1.msra.mxu0 0.0
  %1383 = vmatprep.subr.mxu0 0.0
  %1384 = vmatpush1.msra.mxu0 0.0
  %1385 = vmatprep.subr.mxu0 0.0
  %1386 = vmatpush1.msra.mxu0 0.0
  %1387 = vmatprep.subr.mxu0 0.0
  %1388 = vmatpush1.msra.mxu0 0.0
  %1389 = vmatprep.subr.mxu0 0.0
  %1390 = vmatpush1.msra.mxu0 0.0
  %1391 = vmatprep.mubr.f32.mxu0 0.0
  %1392 = vmatmul.mubr.f32.gmra.mrb[0].mxu0 %v1326
  %v1393 = vpop.f32.mrb[0].mxu0
  %v1394 = vadd.f32 0.0, %v1393
  %v1395 = vpop.f32.mrb[0].mxu0
  %1396 = vdwg.mxu0
  %v1397 = vmul.f32 %v1394, 0.001953125
  %v1398 = vmul.f32 %v1397, %v1397
  %v1400 = vrot.slane %v1398, 7
  %v1402 = vsub.f32 %v1397, %v1400
  %v1403 = vadd.f32 %v1402, 1e-05
  %v1404 = vrsqrt.pop %v1403
  %v1405 = vsel %vm769, %v1397, %v1404
  %v1407 = vsel %vm850, %v1405, 0
  %1409 = vmatprep.subr.mxu0 0.0
  %1410 = vmatpush1.msra.mxu0 %v361
  %1411 = vmatprep.subr.mxu0 0.0
  %1412 = vmatpush1.msra.mxu0 0.0
  %1413 = vmatprep.subr.mxu0 0.0
  %1414 = vmatpush1.msra.mxu0 0.0
  %1415 = vmatprep.subr.mxu0 0.0
  %1416 = vmatpush1.msra.mxu0 0.0
  %1417 = vmatprep.subr.mxu0 0.0
  %1418 = vmatpush1.msra.mxu0 0.0
  %1419 = vmatprep.subr.mxu0 0.0
  %1420 = vmatpush1.msra.mxu0 0.0
  %1421 = vmatprep.subr.mxu0 0.0
  %1422 = vmatpush1.msra.mxu0 0.0
  %1423 = vmatprep.subr.mxu0 0.0
  %1424 = vmatpush1.msra.mxu0 0.0
  %1425 = vmatprep.subr.mxu0 0.0
  %1426 = vmatpush1.msra.mxu0 0.0
  %1427 = vmatprep.subr.mxu0 0.0
  %1428 = vmatpush1.msra.mxu0 0.0
  %1429 = vmatprep.subr.mxu0 0.0
  %1430 = vmatpush1.msra.mxu0 0.0
  %1431 = vmatprep.subr.mxu0 0.0
  %1432 = vmatpush1.msra.mxu0 0.0
  %1433 = vmatprep.subr.mxu0 0.0
  %1434 = vmatpush1.msra.mxu0 0.0
  %1435 = vmatprep.subr.mxu0 0.0
  %1436 = vmatpush1.msra.mxu0 0.0
  %1437 = vmatprep.subr.mxu0 0.0
  %1438 = vmatpush1.msra.mxu0 0.0
  %1439 = vmatprep.subr.mxu0 0.0
  %1440 = vmatpush1.msra.mxu0 0.0
  %1441 = vmatprep.subr.mxu0 0.0
  %1442 = vmatpush1.msra.mxu0 0.0
  %1443 = vmatprep.subr.mxu0 0.0
  %1444 = vmatpush1.msra.mxu0 0.0
  %1445 = vmatprep.subr.mxu0 0.0
  %1446 = vmatpush1.msra.mxu0 0.0
  %1447 = vmatprep.subr.mxu0 0.0
  %1448 = vmatpush1.msra.mxu0 0.0
  %1449 = vmatprep.subr.mxu0 0.0
  %1450 = vmatpush1.msra.mxu0 0.0
  %1451 = vmatprep.subr.mxu0 0.0
  %1452 = vmatpush1.msra.mxu0 0.0
  %1453 = vmatprep.subr.mxu0 0.0
  %1454 = vmatpush1.msra.mxu0 0.0
  %1455 = vmatprep.subr.mxu0 0.0
  %1456 = vmatpush1.msra.mxu0 0.0
  %1457 = vmatprep.subr.mxu0 0.0
  %1458 = vmatpush1.msra.mxu0 0.0
  %1459 = vmatprep.subr.mxu0 0.0
  %1460 = vmatpush1.msra.mxu0 0.0
  %1461 = vmatprep.subr.mxu0 0.0
  %1462 = vmatpush1.msra.mxu0 0.0
  %1463 = vmatprep.subr.mxu0 0.0
  %1464 = vmatpush1.msra.mxu0 0.0
  %1465 = vmatprep.subr.mxu0 0.0
  %1466 = vmatpush1.msra.mxu0 0.0
  %1467 = vmatprep.subr.mxu0 0.0
  %1468 = vmatpush1.msra.mxu0 0.0
  %1469 = vmatprep.subr.mxu0 0.0
  %1470 = vmatpush1.msra.mxu0 0.0
  %1471 = vmatprep.subr.mxu0 0.0
  %1472 = vmatpush1.msra.mxu0 0.0
  %1473 = vmatprep.mubr.f32.mxu0 0.0
  %1474 = vmatmul.mubr.f32.gmra.mrb[0].mxu0 %v1407
  %v1475 = vpop.f32.mrb[0].mxu0
  %v1476 = vadd.f32 0.0, %v1475
  %v1477 = vpop.f32.mrb[0].mxu0
  %1478 = vdwg.mxu0
  %v1480 = vlaneseq
  %v1481 = vshrl.u32 %v1480, 7
  %v1482 = vsub.s32 0, %v1481
  %v1483 = vrot.slane %v1302, %v1482
  %v1485 = vmul.f32 %v1476, %v1483
  %v1487 = vrot.slane %v1485, 1
  %v1489 = vmul.f32 %v1476, %v1487
  %v1490 = vsub.f32 %v1303, %v1489
  %v1491 = vlaneseq
  %v1492 = vshrl.u32 %v1491, 7
  %v1493 = vsub.s32 1, %v1492
  %v1494 = vrot.slane %v1485, %v1493
  %v1495 = vmul.f32 %v1298, %v1494
  %v1496 = vmul.f32 %v1299, %v1494
  %v1497 = vmul.f32 %v1300, %v1494
  %v1498 = vmul.f32 %v1301, %v1494
  %v1500 = vlaneseq
  %v1501 = vshrl.u32 %v1500, 7
  %v1502 = vsub.s32 0, %v1501
  %v1503 = vrot.slane %v1490, %v1502
  %v1505 = vadd.f32 %v1495, %v1503
  %v1506 = vadd.f32 %v1496, %v1503
  %v1507 = vadd.f32 %v1497, %v1503
  %v1508 = vadd.f32 %v1498, %v1503
  %1509 = vst [vmem:[%s9] sm:$0xff] %v1505
  %1510 = vst [vmem:[%s9 + $0x8] sm:$0xff] %v1506
  %1511 = vst [vmem:[%s9 + $0x10] sm:$0xff] %v1507
  %1512 = vst [vmem:[%s9 + $0x18] sm:$0xff] %v1508
  // Predicated region
  $region38: #{double_conv.1} parent=0 // pred_check
    _
  $region39: #{double_conv.1} parent=0 // pred_check_branch
    %1514 = sbr.rel (0) target = $region41
  $region40: #{double_conv.1} parent=0 // pred_region
    _
  $region41: #{double_conv.1} parent=0 // pred_fallthru
    _
  // Predicated region
  $region42: #{double_conv.1} parent=0 // pred_check
    _
  $region43: #{double_conv.1} parent=0 // pred_check_branch
    %1516 = sbr.rel (0) target = $region45
  $region44: #{double_conv.1} parent=0 // pred_region
    _
  $region45: #{double_conv.1} parent=0 // pred_fallthru
    _

</llo_original>
